<compile_context>
chip_gen: v6e
topology: v6e:2x2x1
jax: 0.10.0
libtpu: 0.0.40
codegen_flags: <defaults>
</compile_context>

<pallas_src>
import functools

import jax
import jax.numpy as jnp
import numpy as np
from jax.experimental import pallas as pl
from jax.experimental.pallas import tpu as pltpu


# ----------------------------- math helpers ---------------------------------

def _layernorm(x, gamma, beta, eps=1e-5):
    # Matches torch.nn.LayerNorm: biased variance, eps inside the sqrt.
    mu = jnp.mean(x, axis=-1, keepdims=True)
    var = jnp.mean((x - mu) ** 2, axis=-1, keepdims=True)
    return (x - mu) * jax.lax.rsqrt(var + eps) * gamma + beta


def _gelu_exact(x):
    # torch.nn.GELU() default = exact erf-based GELU (kept for parity; the
    # tanh approximation would ride the EUP slot if tolerance permits).
    return 0.5 * x * (1.0 + jax.lax.erf(x * 0.7071067811865476))


# ------------------------------- the kernel ---------------------------------

def transformer_kernel(x_ref, lnb_ref, wqkv_ref, wout_ref, w1_ref, bb1_ref, w2_ref,
                       o_ref, attn_ref, *, batch_per_block, seq, heads, dim_head):
    layer = pl.program_id(1)
    inner = heads * dim_head
    M = batch_per_block * seq
    bf16 = jnp.bfloat16

    # Layer 0: load the residual stream into the resident output block.
    @pl.when(layer == 0)
    def _():
        o_ref[...] = x_ref[...]

    x = o_ref[...]                       # (M, D) f32 residual stream

    ln = lnb_ref[0]                      # (7, D): g1,b1,g2,b2,g3,b3,bb2
    g1, b1 = ln[0:1], ln[1:2]
    g2, b2 = ln[2:3], ln[3:4]
    g3, b3 = ln[4:5], ln[5:6]
    bb2 = ln[6:7]

    # ---- attention branch: x = Attention(LN_pre(x)) + x ----
    h = _layernorm(x, g1, b1)            # PreNorm.norm
    h = _layernorm(h, g2, b2)            # Attention.norm (module applies both)

    # Fused QKV projection (bf16 MXU, f32 accumulate).  Softmax scale is already
    # folded into the q-columns of wqkv by the wrapper.
    qkv = jnp.dot(h.astype(bf16), wqkv_ref[0].astype(bf16),
                  preferred_element_type=jnp.float32)        # (M, 3*inner)

    # Per-head softmax core, batched over the batch rows of this block via a
    # leading batch dim (documented 'bqd,bkd->bqk' NT pattern — no k.T, no
    # per-batch Python loop).  Head outputs go to a VMEM scratch at static
    # column offsets instead of concatenates.
    # TODO(synk): with dim_head=16 the core still underfills lanes; a fully
    # lane-dense (heads*N, dim_head)-slab layout needs a head<->seq transpose
    # and only pays off at real model sizes.
    for hd in range(heads):
        c0 = hd * dim_head
        qh = qkv[:, c0:c0 + dim_head].reshape(batch_per_block, seq, dim_head)
        kh = qkv[:, inner + c0:inner + c0 + dim_head].reshape(
            batch_per_block, seq, dim_head)
        vh = qkv[:, 2 * inner + c0:2 * inner + c0 + dim_head].reshape(
            batch_per_block, seq, dim_head)

        dots = jnp.einsum('bnd,bmd->bnm', qh.astype(bf16), kh.astype(bf16),
                          preferred_element_type=jnp.float32)   # (bpg, N, N)
        dots = dots - jnp.max(dots, axis=-1, keepdims=True)
        e = jnp.exp(dots)
        p = e * pl.reciprocal(jnp.sum(e, axis=-1, keepdims=True), approx=True)
        oh = jnp.einsum('bnm,bmd->bnd', p.astype(bf16), vh.astype(bf16),
                        preferred_element_type=jnp.float32)     # (bpg, N, dh)
        attn_ref[:, c0:c0 + dim_head] = oh.reshape(M, dim_head)

    # Single fused output projection (M, inner) @ (inner, D).
    attn_out = jnp.dot(attn_ref[...].astype(bf16), wout_ref[0].astype(bf16),
                       preferred_element_type=jnp.float32)
    x = x + attn_out

    # ---- mlp branch: x = MLP(LN_pre(x)) + x ----
    h = _layernorm(x, g3, b3)
    hmid = jnp.dot(h.astype(bf16), w1_ref[0].astype(bf16),
                   preferred_element_type=jnp.float32) + bb1_ref[0]
    hmid = _gelu_exact(hmid)
    mlp_out = jnp.dot(hmid.astype(bf16), w2_ref[0].astype(bf16),
                      preferred_element_type=jnp.float32) + bb2

    o_ref[...] = x + mlp_out             # stays resident until the last layer


# ------------------------------- wrapper -------------------------------------

def transformer_forward(x, params, *, heads, dim_head, row_groups=None):
    """x: (B, N, D) f32.  Params are the raw (unscaled) f32 weights."""
    B, N, D = x.shape
    depth = params["wqkv"].shape[0]
    inner = heads * dim_head
    mlp_dim = params["w1"].shape[2]

    if row_groups is None:
        # Only split across TensorCores (v7x) when the per-core M keeps the MXU
        # filled; otherwise the 2x weight re-stream makes it a net loss.
        row_groups = 2 if (B % 2 == 0 and (B // 2) * N >= 256) else 1
    assert B % row_groups == 0
    bpg = B // row_groups
    M = bpg * N                                      # matmul M per grid step

    # Fold the softmax scale into the q-columns of wqkv (one-time weight
    # transform; in production do this offline at parameter-construction time).
    scale = dim_head ** -0.5
    wqkv = params["wqkv"].at[:, :, :inner].multiply(scale)

    x2 = x.reshape(B * N, D)

    kernel = functools.partial(
        transformer_kernel, batch_per_block=bpg, seq=N,
        heads=heads, dim_head=dim_head)

    def wspec(shape):
        # per-layer weight slab: block index walks the leading depth axis
        nd = len(shape)
        return pl.BlockSpec((1,) + tuple(shape[1:]),
                            lambda g, l, _nd=nd: (l,) + (0,) * (_nd - 1))

    # ---- explicit VMEM budget: double-buffered weights + resident activations.
    per_layer_w_bytes = 4 * (7 * D + D * 3 * inner + inner * D
                             + D * mlp_dim + mlp_dim + mlp_dim * D)
    act_bytes = 4 * M * (2 * D            # x block (double-buffered by default)
                         + D              # resident output block
                         + inner)         # attention scratch
    vmem_needed = 2 * per_layer_w_bytes + act_bytes + (4 << 20)  # + headroom
    try:
        phys_vmem = pltpu.get_tpu_info().vmem_capacity_bytes
    except Exception:                                 # pragma: no cover
        phys_vmem = 128 << 20
    # v5e/v6e: 128 MiB physical; v7x: 64 MiB — clamp accordingly.  At real
    # (ViT-Base) sizes exceeding the clamp, tile the weight N-columns instead.
    vmem_limit = int(min(max(vmem_needed, 32 << 20), int(0.78 * phys_vmem)))

    # ---- advisory cost estimate so XLA schedules around the long custom call.
    rows = B * N
    flops = 2 * depth * rows * (D * 3 * inner + 2 * N * inner + inner * D
                                + 2 * D * mlp_dim)
    transcendentals = depth * rows * (heads * N + mlp_dim + 3)
    bytes_accessed = depth * per_layer_w_bytes + 2 * rows * D * 4

    out = pl.pallas_call(
        kernel,
        out_shape=jax.ShapeDtypeStruct((B * N, D), jnp.float32),
        grid=(row_groups, depth),
        in_specs=[
            # x block index is constant across the depth axis, so it is DMA'd
            # once and re-DMA is elided by the pipeline.
            # TODO(synk): pl.Buffered(1) pipeline_mode here would also drop the
            # second (unused) x buffer — only meaningful at real model sizes.
            pl.BlockSpec((M, D), lambda g, l: (g, 0)),
            wspec(params["lnb"].shape),                  # packed LN params + fc2 bias
            wspec(wqkv.shape),                           # (depth, D, 3*inner), q pre-scaled
            wspec(params["wout"].shape),                 # (depth, inner, D)
            wspec(params["w1"].shape),                   # (depth, D, mlp_dim)
            wspec(params["bb1"].shape),                  # (depth, 1, mlp_dim)
            wspec(params["w2"].shape),                   # (depth, mlp_dim, D)
        ],
        out_specs=pl.BlockSpec((M, D), lambda g, l: (g, 0)),
        scratch_shapes=[pltpu.VMEM((M, inner), jnp.float32)],   # attention output slab
        compiler_params=pltpu.CompilerParams(
            dimension_semantics=("parallel", "arbitrary"),
            vmem_limit_bytes=vmem_limit),
        cost_estimate=pl.CostEstimate(flops=int(flops),
                                      transcendentals=int(transcendentals),
                                      bytes_accessed=int(bytes_accessed)),
    )(x2, params["lnb"], wqkv, params["wout"],
      params["w1"], params["bb1"], params["w2"])

    return out.reshape(B, N, D)


# --------------------------- parameter construction --------------------------

def init_params(key, depth, dim, heads, dim_head, mlp_dim):
    inner = heads * dim_head
    lnb, wqkv, wout, w1, bb1, w2 = [], [], [], [], [], []
    for _ in range(depth):
        key, *ks = jax.random.split(key, 13)
        wqkv.append(jax.random.normal(ks[0], (dim, 3 * inner), jnp.float32) * 0.05)
        wout.append(jax.random.normal(ks[1], (inner, dim), jnp.float32) * 0.05)
        w1.append(jax.random.normal(ks[2], (dim, mlp_dim), jnp.float32) * 0.05)
        bb1.append(jax.random.normal(ks[3], (1, mlp_dim), jnp.float32) * 0.05)
        w2.append(jax.random.normal(ks[4], (mlp_dim, dim), jnp.float32) * 0.05)
        bb2 = jax.random.normal(ks[5], (dim,), jnp.float32) * 0.05
        g1 = 1.0 + 0.1 * jax.random.normal(ks[6], (dim,), jnp.float32)
        b1 = 0.1 * jax.random.normal(ks[7], (dim,), jnp.float32)
        g2 = 1.0 + 0.1 * jax.random.normal(ks[8], (dim,), jnp.float32)
        b2 = 0.1 * jax.random.normal(ks[9], (dim,), jnp.float32)
        g3 = 1.0 + 0.1 * jax.random.normal(ks[10], (dim,), jnp.float32)
        b3 = 0.1 * jax.random.normal(ks[11], (dim,), jnp.float32)
        lnb.append(jnp.stack([g1, b1, g2, b2, g3, b3, bb2], axis=0))   # (7, D)
    return dict(lnb=jnp.stack(lnb), wqkv=jnp.stack(wqkv), wout=jnp.stack(wout),
                w1=jnp.stack(w1), bb1=jnp.stack(bb1), w2=jnp.stack(w2))


# ------------------------------ pure-JAX reference ---------------------------

def reference_forward(x, p, *, heads, dim_head):
    """Mirrors the PyTorch module exactly (f32 math, explicit softmax scale)."""
    depth = p["wqkv"].shape[0]
    inner = heads * dim_head
    scale = dim_head ** -0.5
    B, N, D = x.shape
    for l in range(depth):
        ln = p["lnb"][l]
        g1, b1, g2, b2, g3, b3, bb2 = [ln[i:i + 1] for i in range(7)]
        h = _layernorm(x, g1, b1)
        h = _layernorm(h, g2, b2)
        qkv = h @ p["wqkv"][l]                               # (B, N, 3*inner)
        q, k, v = jnp.split(qkv, 3, axis=-1)
        q = q.reshape(B, N, heads, dim_head).transpose(0, 2, 1, 3)
        k = k.reshape(B, N, heads, dim_head).transpose(0, 2, 1, 3)
        v = v.reshape(B, N, heads, dim_head).transpose(0, 2, 1, 3)
        dots = jnp.einsum("bhnd,bhmd->bhnm", q, k) * scale
        attn = jax.nn.softmax(dots, axis=-1)
        out = jnp.einsum("bhnm,bhmd->bhnd", attn, v)
        out = out.transpose(0, 2, 1, 3).reshape(B, N, inner)
        x = x + out @ p["wout"][l]
        h = _layernorm(x, g3, b3)
        hmid = _gelu_exact(h @ p["w1"][l] + p["bb1"][l])
        x = x + hmid @ p["w2"][l] + bb2
    return x


# ----------------------------------- main ------------------------------------

if __name__ == "__main__":
    # Transformer(dim=32, depth=2, heads=2, dim_head=16, mlp_dim=64)
    B, N, DIM = 2, 8, 32
    DEPTH, HEADS, DIM_HEAD, MLP_DIM = 2, 2, 16, 64

    root = jax.random.PRNGKey(0)
    kx, kp = jax.random.split(root)
    x = jax.random.normal(kx, (B, N, DIM), jnp.float32)
    params = init_params(kp, DEPTH, DIM, HEADS, DIM_HEAD, MLP_DIM)

    out = transformer_forward(x, params, heads=HEADS, dim_head=DIM_HEAD)
    out = jax.block_until_ready(out)

    ref = jax.block_until_ready(
        reference_forward(x, params, heads=HEADS, dim_head=DIM_HEAD))
    # bf16 MXU operands + approximate softmax reciprocal => ~1e-3 abs error at
    # these magnitudes; 2e-2 tolerance keeps ample margin.
    np.testing.assert_allclose(np.asarray(out), np.asarray(ref),
                               rtol=2e-2, atol=2e-2)

    print("KERNEL_OK")
</pallas_src>

<mosaic_0001>
module attributes {stable_mosaic.version = 11 : i64} {
  func.func @transformer_kernel(%arg0: i32, %arg1: i32, %arg2: memref<16x32xf32, #tpu.memory_space<vmem>>, %arg3: memref<1x7x32xf32, #tpu.memory_space<vmem>>, %arg4: memref<1x32x96xf32, #tpu.memory_space<vmem>>, %arg5: memref<1x32x32xf32, #tpu.memory_space<vmem>>, %arg6: memref<1x32x64xf32, #tpu.memory_space<vmem>>, %arg7: memref<1x1x64xf32, #tpu.memory_space<vmem>>, %arg8: memref<1x64x32xf32, #tpu.memory_space<vmem>>, %arg9: memref<16x32xf32, #tpu.memory_space<vmem>>, %arg10: memref<16x32xf32, #tpu.memory_space<vmem>>) attributes {dimension_semantics = [#tpu.dimension_semantics<parallel>, #tpu.dimension_semantics<arbitrary>], iteration_bounds = array<i64: 1, 2>, scalar_prefetch = 0 : i64, scratch_operands = 1 : i64, tpu.core_type = #tpu.core_type<tc>, window_params = [{transform_indices = @transform_0, window_bounds = array<i64: 16, 32>}, {transform_indices = @transform_1, window_bounds = array<i64: 1, 7, 32>}, {transform_indices = @transform_2, window_bounds = array<i64: 1, 32, 96>}, {transform_indices = @transform_3, window_bounds = array<i64: 1, 32, 32>}, {transform_indices = @transform_4, window_bounds = array<i64: 1, 32, 64>}, {transform_indices = @transform_5, window_bounds = array<i64: 1, 1, 64>}, {transform_indices = @transform_6, window_bounds = array<i64: 1, 64, 32>}, {transform_indices = @transform_7, window_bounds = array<i64: 16, 32>}]} {
    %c0_i32 = arith.constant 0 : i32
    %0 = arith.cmpi eq, %arg1, %c0_i32 : i32
    %1 = arith.extui %0 : i1 to i32
    %c0_i32_0 = arith.constant 0 : i32
    %2 = arith.cmpi ne, %1, %c0_i32_0 : i32
    scf.if %2 {
      %c0_56 = arith.constant 0 : index
      %c0_57 = arith.constant 0 : index
      %165 = vector.load %arg2[%c0_56, %c0_57] : memref<16x32xf32, #tpu.memory_space<vmem>>, vector<16x32xf32>
      %c0_58 = arith.constant 0 : index
      %c0_59 = arith.constant 0 : index
      %166 = vector.load %arg9[%c0_58, %c0_59] : memref<16x32xf32, #tpu.memory_space<vmem>>, vector<16x32xf32>
      tpu.vector_store %arg9[%c0_58, %c0_59], %165 {strides = array<i32>} : memref<16x32xf32, #tpu.memory_space<vmem>>, vector<16x32xf32>,
    } else {
    }
    %c0 = arith.constant 0 : index
    %c0_1 = arith.constant 0 : index
    %3 = vector.load %arg9[%c0, %c0_1] : memref<16x32xf32, #tpu.memory_space<vmem>>, vector<16x32xf32>
    %c0_2 = arith.constant 0 : index
    %c0_3 = arith.constant 0 : index
    %c0_4 = arith.constant 0 : index
    %4 = vector.load %arg3[%c0_2, %c0_3, %c0_4] : memref<1x7x32xf32, #tpu.memory_space<vmem>>, vector<1x7x32xf32>
    %5 = vector.shape_cast %4 : vector<1x7x32xf32> to vector<7x32xf32>
    %6 = vector.extract_strided_slice %5 {offsets = [0, 0], sizes = [1, 32], strides = [1, 1]} : vector<7x32xf32> to vector<1x32xf32>
    %7 = vector.extract_strided_slice %5 {offsets = [1, 0], sizes = [1, 32], strides = [1, 1]} : vector<7x32xf32> to vector<1x32xf32>
    %8 = vector.extract_strided_slice %5 {offsets = [2, 0], sizes = [1, 32], strides = [1, 1]} : vector<7x32xf32> to vector<1x32xf32>
    %9 = vector.extract_strided_slice %5 {offsets = [3, 0], sizes = [1, 32], strides = [1, 1]} : vector<7x32xf32> to vector<1x32xf32>
    %10 = vector.extract_strided_slice %5 {offsets = [4, 0], sizes = [1, 32], strides = [1, 1]} : vector<7x32xf32> to vector<1x32xf32>
    %11 = vector.extract_strided_slice %5 {offsets = [5, 0], sizes = [1, 32], strides = [1, 1]} : vector<7x32xf32> to vector<1x32xf32>
    %12 = vector.extract_strided_slice %5 {offsets = [6, 0], sizes = [1, 32], strides = [1, 1]} : vector<7x32xf32> to vector<1x32xf32>
    %cst = arith.constant dense<0.000000e+00> : vector<16xf32>
    %13 = vector.multi_reduction <add>, %3, %cst [1] : vector<16x32xf32> to vector<16xf32>
    %14 = vector.shape_cast %13 : vector<16xf32> to vector<16x1xf32>
    %cst_5 = arith.constant 3.200000e+01 : f32
    %15 = vector.broadcast %cst_5 : f32 to vector<16x1xf32>
    %16 = arith.divf %14, %15 : vector<16x1xf32>
    %17 = vector.broadcast %16 : vector<16x1xf32> to vector<16x32xf32>
    %18 = arith.subf %3, %17 : vector<16x32xf32>
    %19 = arith.mulf %18, %18 : vector<16x32xf32>
    %cst_6 = arith.constant dense<0.000000e+00> : vector<16xf32>
    %20 = vector.multi_reduction <add>, %19, %cst_6 [1] : vector<16x32xf32> to vector<16xf32>
    %21 = vector.shape_cast %20 : vector<16xf32> to vector<16x1xf32>
    %cst_7 = arith.constant 3.200000e+01 : f32
    %22 = vector.broadcast %cst_7 : f32 to vector<16x1xf32>
    %23 = arith.divf %21, %22 : vector<16x1xf32>
    %24 = vector.broadcast %16 : vector<16x1xf32> to vector<16x32xf32>
    %25 = arith.subf %3, %24 : vector<16x32xf32>
    %cst_8 = arith.constant 9.99999974E-6 : f32
    %26 = vector.broadcast %cst_8 : f32 to vector<16x1xf32>
    %27 = arith.addf %23, %26 : vector<16x1xf32>
    %28 = math.rsqrt %27 : vector<16x1xf32>
    %29 = vector.broadcast %28 : vector<16x1xf32> to vector<16x32xf32>
    %30 = arith.mulf %25, %29 : vector<16x32xf32>
    %31 = vector.broadcast %6 : vector<1x32xf32> to vector<16x32xf32>
    %32 = arith.mulf %30, %31 : vector<16x32xf32>
    %33 = vector.broadcast %7 : vector<1x32xf32> to vector<16x32xf32>
    %34 = arith.addf %32, %33 : vector<16x32xf32>
    %cst_9 = arith.constant dense<0.000000e+00> : vector<16xf32>
    %35 = vector.multi_reduction <add>, %34, %cst_9 [1] : vector<16x32xf32> to vector<16xf32>
    %36 = vector.shape_cast %35 : vector<16xf32> to vector<16x1xf32>
    %cst_10 = arith.constant 3.200000e+01 : f32
    %37 = vector.broadcast %cst_10 : f32 to vector<16x1xf32>
    %38 = arith.divf %36, %37 : vector<16x1xf32>
    %39 = vector.broadcast %38 : vector<16x1xf32> to vector<16x32xf32>
    %40 = arith.subf %34, %39 : vector<16x32xf32>
    %41 = arith.mulf %40, %40 : vector<16x32xf32>
    %cst_11 = arith.constant dense<0.000000e+00> : vector<16xf32>
    %42 = vector.multi_reduction <add>, %41, %cst_11 [1] : vector<16x32xf32> to vector<16xf32>
    %43 = vector.shape_cast %42 : vector<16xf32> to vector<16x1xf32>
    %cst_12 = arith.constant 3.200000e+01 : f32
    %44 = vector.broadcast %cst_12 : f32 to vector<16x1xf32>
    %45 = arith.divf %43, %44 : vector<16x1xf32>
    %46 = vector.broadcast %38 : vector<16x1xf32> to vector<16x32xf32>
    %47 = arith.subf %34, %46 : vector<16x32xf32>
    %cst_13 = arith.constant 9.99999974E-6 : f32
    %48 = vector.broadcast %cst_13 : f32 to vector<16x1xf32>
    %49 = arith.addf %45, %48 : vector<16x1xf32>
    %50 = math.rsqrt %49 : vector<16x1xf32>
    %51 = vector.broadcast %50 : vector<16x1xf32> to vector<16x32xf32>
    %52 = arith.mulf %47, %51 : vector<16x32xf32>
    %53 = vector.broadcast %8 : vector<1x32xf32> to vector<16x32xf32>
    %54 = arith.mulf %52, %53 : vector<16x32xf32>
    %55 = vector.broadcast %9 : vector<1x32xf32> to vector<16x32xf32>
    %56 = arith.addf %54, %55 : vector<16x32xf32>
    %57 = arith.truncf %56 : vector<16x32xf32> to vector<16x32xbf16>
    %c0_14 = arith.constant 0 : index
    %c0_15 = arith.constant 0 : index
    %c0_16 = arith.constant 0 : index
    %58 = vector.load %arg4[%c0_14, %c0_15, %c0_16] : memref<1x32x96xf32, #tpu.memory_space<vmem>>, vector<1x32x96xf32>
    %59 = vector.shape_cast %58 : vector<1x32x96xf32> to vector<32x96xf32>
    %60 = arith.truncf %59 : vector<32x96xf32> to vector<32x96xbf16>
    %cst_17 = arith.constant dense<0.000000e+00> : vector<16x96xf32>
    %61 = tpu.matmul %57, %60, %cst_17 {dimension_numbers = #tpu.dot_dimension_numbers<[1], [0], [0], [1], [0, 0, 1, 1], [], []>} : vector<16x32xbf16>, vector<32x96xbf16>, vector<16x96xf32> -> vector<16x96xf32>
    %62 = vector.extract_strided_slice %61 {offsets = [0, 0], sizes = [16, 16], strides = [1, 1]} : vector<16x96xf32> to vector<16x16xf32>
    %63 = vector.shape_cast %62 : vector<16x16xf32> to vector<2x8x16xf32>
    %64 = vector.extract_strided_slice %61 {offsets = [0, 32], sizes = [16, 16], strides = [1, 1]} : vector<16x96xf32> to vector<16x16xf32>
    %65 = vector.shape_cast %64 : vector<16x16xf32> to vector<2x8x16xf32>
    %66 = vector.extract_strided_slice %61 {offsets = [0, 64], sizes = [16, 16], strides = [1, 1]} : vector<16x96xf32> to vector<16x16xf32>
    %67 = vector.shape_cast %66 : vector<16x16xf32> to vector<2x8x16xf32>
    %68 = arith.truncf %63 : vector<2x8x16xf32> to vector<2x8x16xbf16>
    %69 = arith.truncf %65 : vector<2x8x16xf32> to vector<2x8x16xbf16>
    "tpu.trace_start"() <{level = 10 : i32, message = "bnd,bmd->bnm"}> : () -> ()
    %cst_18 = arith.constant dense<0.000000e+00> : vector<2x8x8xf32>
    %70 = tpu.matmul %68, %69, %cst_18 {dimension_numbers = #tpu.dot_dimension_numbers<[2], [2], [1], [1], [0, 0, 0, 1, 1, 1], [0], [0]>} : vector<2x8x16xbf16>, vector<2x8x16xbf16>, vector<2x8x8xf32> -> vector<2x8x8xf32>
    "tpu.trace_stop"() : () -> ()
    %cst_19 = arith.constant dense<0xFF800000> : vector<2x8xf32>
    %71 = vector.multi_reduction <maximumf>, %70, %cst_19 [2] : vector<2x8x8xf32> to vector<2x8xf32>
    %72 = vector.shape_cast %71 : vector<2x8xf32> to vector<2x8x1xf32>
    %73 = vector.broadcast %72 : vector<2x8x1xf32> to vector<2x8x8xf32>
    %74 = arith.subf %70, %73 : vector<2x8x8xf32>
    %75 = math.exp %74 : vector<2x8x8xf32>
    %cst_20 = arith.constant dense<0.000000e+00> : vector<2x8xf32>
    %76 = vector.multi_reduction <add>, %75, %cst_20 [2] : vector<2x8x8xf32> to vector<2x8xf32>
    %77 = vector.shape_cast %76 : vector<2x8xf32> to vector<2x8x1xf32>
    %78 = tpu.reciprocal %77 {approx = true} : vector<2x8x1xf32> -> vector<2x8x1xf32>
    %79 = vector.broadcast %78 : vector<2x8x1xf32> to vector<2x8x8xf32>
    %80 = arith.mulf %75, %79 : vector<2x8x8xf32>
    %81 = arith.truncf %80 : vector<2x8x8xf32> to vector<2x8x8xbf16>
    %82 = arith.truncf %67 : vector<2x8x16xf32> to vector<2x8x16xbf16>
    "tpu.trace_start"() <{level = 10 : i32, message = "bnm,bmd->bnd"}> : () -> ()
    %cst_21 = arith.constant dense<0.000000e+00> : vector<2x8x16xf32>
    %83 = tpu.matmul %81, %82, %cst_21 {dimension_numbers = #tpu.dot_dimension_numbers<[2], [1], [1], [2], [0, 0, 0, 1, 1, 2], [0], [0]>} : vector<2x8x8xbf16>, vector<2x8x16xbf16>, vector<2x8x16xf32> -> vector<2x8x16xf32>
    "tpu.trace_stop"() : () -> ()
    %84 = vector.shape_cast %83 : vector<2x8x16xf32> to vector<16x16xf32>
    %c0_22 = arith.constant 0 : index
    %c0_23 = arith.constant 0 : index
    %85 = vector.load %arg10[%c0_22, %c0_23] : memref<16x32xf32, #tpu.memory_space<vmem>>, vector<16x16xf32>
    tpu.vector_store %arg10[%c0_22, %c0_23], %84 {strides = array<i32>} : memref<16x32xf32, #tpu.memory_space<vmem>>, vector<16x16xf32>,
    %86 = vector.extract_strided_slice %61 {offsets = [0, 16], sizes = [16, 16], strides = [1, 1]} : vector<16x96xf32> to vector<16x16xf32>
    %87 = vector.shape_cast %86 : vector<16x16xf32> to vector<2x8x16xf32>
    %88 = vector.extract_strided_slice %61 {offsets = [0, 48], sizes = [16, 16], strides = [1, 1]} : vector<16x96xf32> to vector<16x16xf32>
    %89 = vector.shape_cast %88 : vector<16x16xf32> to vector<2x8x16xf32>
    %90 = vector.extract_strided_slice %61 {offsets = [0, 80], sizes = [16, 16], strides = [1, 1]} : vector<16x96xf32> to vector<16x16xf32>
    %91 = vector.shape_cast %90 : vector<16x16xf32> to vector<2x8x16xf32>
    %92 = arith.truncf %87 : vector<2x8x16xf32> to vector<2x8x16xbf16>
    %93 = arith.truncf %89 : vector<2x8x16xf32> to vector<2x8x16xbf16>
    "tpu.trace_start"() <{level = 10 : i32, message = "bnd,bmd->bnm"}> : () -> ()
    %cst_24 = arith.constant dense<0.000000e+00> : vector<2x8x8xf32>
    %94 = tpu.matmul %92, %93, %cst_24 {dimension_numbers = #tpu.dot_dimension_numbers<[2], [2], [1], [1], [0, 0, 0, 1, 1, 1], [0], [0]>} : vector<2x8x16xbf16>, vector<2x8x16xbf16>, vector<2x8x8xf32> -> vector<2x8x8xf32>
    "tpu.trace_stop"() : () -> ()
    %cst_25 = arith.constant dense<0xFF800000> : vector<2x8xf32>
    %95 = vector.multi_reduction <maximumf>, %94, %cst_25 [2] : vector<2x8x8xf32> to vector<2x8xf32>
    %96 = vector.shape_cast %95 : vector<2x8xf32> to vector<2x8x1xf32>
    %97 = vector.broadcast %96 : vector<2x8x1xf32> to vector<2x8x8xf32>
    %98 = arith.subf %94, %97 : vector<2x8x8xf32>
    %99 = math.exp %98 : vector<2x8x8xf32>
    %cst_26 = arith.constant dense<0.000000e+00> : vector<2x8xf32>
    %100 = vector.multi_reduction <add>, %99, %cst_26 [2] : vector<2x8x8xf32> to vector<2x8xf32>
    %101 = vector.shape_cast %100 : vector<2x8xf32> to vector<2x8x1xf32>
    %102 = tpu.reciprocal %101 {approx = true} : vector<2x8x1xf32> -> vector<2x8x1xf32>
    %103 = vector.broadcast %102 : vector<2x8x1xf32> to vector<2x8x8xf32>
    %104 = arith.mulf %99, %103 : vector<2x8x8xf32>
    %105 = arith.truncf %104 : vector<2x8x8xf32> to vector<2x8x8xbf16>
    %106 = arith.truncf %91 : vector<2x8x16xf32> to vector<2x8x16xbf16>
    "tpu.trace_start"() <{level = 10 : i32, message = "bnm,bmd->bnd"}> : () -> ()
    %cst_27 = arith.constant dense<0.000000e+00> : vector<2x8x16xf32>
    %107 = tpu.matmul %105, %106, %cst_27 {dimension_numbers = #tpu.dot_dimension_numbers<[2], [1], [1], [2], [0, 0, 0, 1, 1, 2], [0], [0]>} : vector<2x8x8xbf16>, vector<2x8x16xbf16>, vector<2x8x16xf32> -> vector<2x8x16xf32>
    "tpu.trace_stop"() : () -> ()
    %108 = vector.shape_cast %107 : vector<2x8x16xf32> to vector<16x16xf32>
    %c0_28 = arith.constant 0 : index
    %c16 = arith.constant 16 : index
    %109 = vector.load %arg10[%c0_28, %c16] : memref<16x32xf32, #tpu.memory_space<vmem>>, vector<16x16xf32>
    tpu.vector_store %arg10[%c0_28, %c16], %108 {strides = array<i32>} : memref<16x32xf32, #tpu.memory_space<vmem>>, vector<16x16xf32>,
    %c0_29 = arith.constant 0 : index
    %c0_30 = arith.constant 0 : index
    %110 = vector.load %arg10[%c0_29, %c0_30] : memref<16x32xf32, #tpu.memory_space<vmem>>, vector<16x32xf32>
    %111 = arith.truncf %110 : vector<16x32xf32> to vector<16x32xbf16>
    %c0_31 = arith.constant 0 : index
    %c0_32 = arith.constant 0 : index
    %c0_33 = arith.constant 0 : index
    %112 = vector.load %arg5[%c0_31, %c0_32, %c0_33] : memref<1x32x32xf32, #tpu.memory_space<vmem>>, vector<1x32x32xf32>
    %113 = vector.shape_cast %112 : vector<1x32x32xf32> to vector<32x32xf32>
    %114 = arith.truncf %113 : vector<32x32xf32> to vector<32x32xbf16>
    %cst_34 = arith.constant dense<0.000000e+00> : vector<16x32xf32>
    %115 = tpu.matmul %111, %114, %cst_34 {dimension_numbers = #tpu.dot_dimension_numbers<[1], [0], [0], [1], [0, 0, 1, 1], [], []>} : vector<16x32xbf16>, vector<32x32xbf16>, vector<16x32xf32> -> vector<16x32xf32>
    %116 = arith.addf %3, %115 : vector<16x32xf32>
    %cst_35 = arith.constant dense<0.000000e+00> : vector<16xf32>
    %117 = vector.multi_reduction <add>, %116, %cst_35 [1] : vector<16x32xf32> to vector<16xf32>
    %118 = vector.shape_cast %117 : vector<16xf32> to vector<16x1xf32>
    %cst_36 = arith.constant 3.200000e+01 : f32
    %119 = vector.broadcast %cst_36 : f32 to vector<16x1xf32>
    %120 = arith.divf %118, %119 : vector<16x1xf32>
    %121 = vector.broadcast %120 : vector<16x1xf32> to vector<16x32xf32>
    %122 = arith.subf %116, %121 : vector<16x32xf32>
    %123 = arith.mulf %122, %122 : vector<16x32xf32>
    %cst_37 = arith.constant dense<0.000000e+00> : vector<16xf32>
    %124 = vector.multi_reduction <add>, %123, %cst_37 [1] : vector<16x32xf32> to vector<16xf32>
    %125 = vector.shape_cast %124 : vector<16xf32> to vector<16x1xf32>
    %cst_38 = arith.constant 3.200000e+01 : f32
    %126 = vector.broadcast %cst_38 : f32 to vector<16x1xf32>
    %127 = arith.divf %125, %126 : vector<16x1xf32>
    %128 = vector.broadcast %120 : vector<16x1xf32> to vector<16x32xf32>
    %129 = arith.subf %116, %128 : vector<16x32xf32>
    %cst_39 = arith.constant 9.99999974E-6 : f32
    %130 = vector.broadcast %cst_39 : f32 to vector<16x1xf32>
    %131 = arith.addf %127, %130 : vector<16x1xf32>
    %132 = math.rsqrt %131 : vector<16x1xf32>
    %133 = vector.broadcast %132 : vector<16x1xf32> to vector<16x32xf32>
    %134 = arith.mulf %129, %133 : vector<16x32xf32>
    %135 = vector.broadcast %10 : vector<1x32xf32> to vector<16x32xf32>
    %136 = arith.mulf %134, %135 : vector<16x32xf32>
    %137 = vector.broadcast %11 : vector<1x32xf32> to vector<16x32xf32>
    %138 = arith.addf %136, %137 : vector<16x32xf32>
    %139 = arith.truncf %138 : vector<16x32xf32> to vector<16x32xbf16>
    %c0_40 = arith.constant 0 : index
    %c0_41 = arith.constant 0 : index
    %c0_42 = arith.constant 0 : index
    %140 = vector.load %arg6[%c0_40, %c0_41, %c0_42] : memref<1x32x64xf32, #tpu.memory_space<vmem>>, vector<1x32x64xf32>
    %141 = vector.shape_cast %140 : vector<1x32x64xf32> to vector<32x64xf32>
    %142 = arith.truncf %141 : vector<32x64xf32> to vector<32x64xbf16>
    %cst_43 = arith.constant dense<0.000000e+00> : vector<16x64xf32>
    %143 = tpu.matmul %139, %142, %cst_43 {dimension_numbers = #tpu.dot_dimension_numbers<[1], [0], [0], [1], [0, 0, 1, 1], [], []>} : vector<16x32xbf16>, vector<32x64xbf16>, vector<16x64xf32> -> vector<16x64xf32>
    %c0_44 = arith.constant 0 : index
    %c0_45 = arith.constant 0 : index
    %c0_46 = arith.constant 0 : index
    %144 = vector.load %arg7[%c0_44, %c0_45, %c0_46] : memref<1x1x64xf32, #tpu.memory_space<vmem>>, vector<1x1x64xf32>
    %145 = vector.shape_cast %144 : vector<1x1x64xf32> to vector<1x64xf32>
    %146 = vector.broadcast %145 : vector<1x64xf32> to vector<16x64xf32>
    %147 = arith.addf %143, %146 : vector<16x64xf32>
    %cst_47 = arith.constant 5.000000e-01 : f32
    %148 = vector.broadcast %cst_47 : f32 to vector<16x64xf32>
    %149 = arith.mulf %148, %147 : vector<16x64xf32>
    %cst_48 = arith.constant 0.707106769 : f32
    %150 = vector.broadcast %cst_48 : f32 to vector<16x64xf32>
    %151 = arith.mulf %147, %150 : vector<16x64xf32>
    %152 = math.erf %151 : vector<16x64xf32>
    %cst_49 = arith.constant 1.000000e+00 : f32
    %153 = vector.broadcast %cst_49 : f32 to vector<16x64xf32>
    %154 = arith.addf %153, %152 : vector<16x64xf32>
    %155 = arith.mulf %149, %154 : vector<16x64xf32>
    %156 = arith.truncf %155 : vector<16x64xf32> to vector<16x64xbf16>
    %c0_50 = arith.constant 0 : index
    %c0_51 = arith.constant 0 : index
    %c0_52 = arith.constant 0 : index
    %157 = vector.load %arg8[%c0_50, %c0_51, %c0_52] : memref<1x64x32xf32, #tpu.memory_space<vmem>>, vector<1x64x32xf32>
    %158 = vector.shape_cast %157 : vector<1x64x32xf32> to vector<64x32xf32>
    %159 = arith.truncf %158 : vector<64x32xf32> to vector<64x32xbf16>
    %cst_53 = arith.constant dense<0.000000e+00> : vector<16x32xf32>
    %160 = tpu.matmul %156, %159, %cst_53 {dimension_numbers = #tpu.dot_dimension_numbers<[1], [0], [0], [1], [0, 0, 1, 1], [], []>} : vector<16x64xbf16>, vector<64x32xbf16>, vector<16x32xf32> -> vector<16x32xf32>
    %161 = vector.broadcast %12 : vector<1x32xf32> to vector<16x32xf32>
    %162 = arith.addf %160, %161 : vector<16x32xf32>
    %163 = arith.addf %116, %162 : vector<16x32xf32>
    %c0_54 = arith.constant 0 : index
    %c0_55 = arith.constant 0 : index
    %164 = vector.load %arg9[%c0_54, %c0_55] : memref<16x32xf32, #tpu.memory_space<vmem>>, vector<16x32xf32>
    tpu.vector_store %arg9[%c0_54, %c0_55], %163 {strides = array<i32>} : memref<16x32xf32, #tpu.memory_space<vmem>>, vector<16x32xf32>,
    return
  }
  func.func @transform_0(%arg0: i32, %arg1: i32) -> (i32, i32) {
    %c0_i32 = arith.constant 0 : i32
    %c0_i32_0 = arith.constant 0 : i32
    return %arg0, %c0_i32 : i32, i32
  }
  func.func @transform_1(%arg0: i32, %arg1: i32) -> (i32, i32, i32) {
    %c0_i32 = arith.constant 0 : i32
    %c0_i32_0 = arith.constant 0 : i32
    %c0_i32_1 = arith.constant 0 : i32
    return %arg1, %c0_i32, %c0_i32_0 : i32, i32, i32
  }
  func.func @transform_2(%arg0: i32, %arg1: i32) -> (i32, i32, i32) {
    %c0_i32 = arith.constant 0 : i32
    %c0_i32_0 = arith.constant 0 : i32
    %c0_i32_1 = arith.constant 0 : i32
    return %arg1, %c0_i32, %c0_i32_0 : i32, i32, i32
  }
  func.func @transform_3(%arg0: i32, %arg1: i32) -> (i32, i32, i32) {
    %c0_i32 = arith.constant 0 : i32
    %c0_i32_0 = arith.constant 0 : i32
    %c0_i32_1 = arith.constant 0 : i32
    return %arg1, %c0_i32, %c0_i32_0 : i32, i32, i32
  }
  func.func @transform_4(%arg0: i32, %arg1: i32) -> (i32, i32, i32) {
    %c0_i32 = arith.constant 0 : i32
    %c0_i32_0 = arith.constant 0 : i32
    %c0_i32_1 = arith.constant 0 : i32
    return %arg1, %c0_i32, %c0_i32_0 : i32, i32, i32
  }
  func.func @transform_5(%arg0: i32, %arg1: i32) -> (i32, i32, i32) {
    %c0_i32 = arith.constant 0 : i32
    %c0_i32_0 = arith.constant 0 : i32
    %c0_i32_1 = arith.constant 0 : i32
    return %arg1, %c0_i32, %c0_i32_0 : i32, i32, i32
  }
  func.func @transform_6(%arg0: i32, %arg1: i32) -> (i32, i32, i32) {
    %c0_i32 = arith.constant 0 : i32
    %c0_i32_0 = arith.constant 0 : i32
    %c0_i32_1 = arith.constant 0 : i32
    return %arg1, %c0_i32, %c0_i32_0 : i32, i32, i32
  }
  func.func @transform_7(%arg0: i32, %arg1: i32) -> (i32, i32) {
    %c0_i32 = arith.constant 0 : i32
    %c0_i32_0 = arith.constant 0 : i32
    return %arg0, %c0_i32 : i32, i32
  }
}

</mosaic_0001>

<llo_original>
// kernel: tpu_custom_call.1
$region0: #{tpu_custom_call.1}
  #allocation0 [shape = 'u32[]', space=smem, size = 0x4, offset = 0x4, fixed_abs, tag = 'smem constant byte address 0x4 - core index']
  #allocation1 [shape = 'u32[144,128]{1,0:T(1,128)}', space=vmem, size = 0x12000, scoped, tag = 'internal scratch']
  #allocation2 [shape = 'f32[16,32]{1,0:T(8,128)}', space=vmem, size = 0x2000, scoped, tag = 'scratch operand']
  %s0 = inlined_call_operand.vmem [shape: f32[16,32], index: 0, kind: input, shape index: {}]
  %s1 = inlined_call_operand.vmem [shape: f32[2,7,32], index: 1, kind: input, shape index: {}]
  %s2 = inlined_call_operand.vmem [shape: f32[2,32,96], index: 2, kind: input, shape index: {}]
  %s3 = inlined_call_operand.vmem [shape: f32[2,32,32], index: 3, kind: input, shape index: {}]
  %s4 = inlined_call_operand.vmem [shape: f32[2,32,64], index: 4, kind: input, shape index: {}]
  %s5 = inlined_call_operand.vmem [shape: f32[2,1,64], index: 5, kind: input, shape index: {}]
  %s6 = inlined_call_operand.vmem [shape: f32[2,64,32], index: 6, kind: input, shape index: {}]
  %s7 = inlined_call_operand.hbm [shape: f32[16,32], index: 7, kind: output, shape index: {}]
  %s8 = sld [smem:[#allocation0]]
  $region65: #{tpu_custom_call.1} parent=0
    _
  %s10 = ssub.s32 1, %s8
  %s11 = scalar_select 0, %s10, %s8
  $region1: #{tpu_custom_call.1} parent=0
    #allocation3 [shape = 'u8[8192]{0}', space=vmem, size = 0x2000, scoped, tag = 'output window, operand 0, single buffered']
    #allocation4 [shape = 's32[2]{0}', space=sflag, size = 0x8, scoped, tag = 'scoped memory for tpu_custom_call.1']
    %12 = vsyncpa [#allocation4], 0
    loop: start=0, step=1, limit=4
    $region2: #{tpu_custom_call.1} parent=1 // loop_pre_header
      _
    $region3: #{tpu_custom_call.1} parent=1 // loop_header
      %s14 = sphi 0, %s18
      %p15 = scmp.ge.s32.totalorder %s14, 4
      %s21 = sphi 0, %s33
      %s22 = sphi 0, %s29
      %s23 = sphi 0, %s21
      %s24 = sphi 0, %s22
      %s25 = sphi 0, %s23
      %s26 = sphi 0, %s24
      %s36 = sphi 0, %s38
      %s39 = sphi 0, %s36
      %s40 = sphi 0, %s39
      %s56 = sphi 0, %s40
      %s62 = sphi 0, %s64
      %s65 = sphi 0, %s62
      %s66 = sphi 0, %s65
      %s82 = sphi 0, %s66
      %s88 = sphi 0, %s90
      %s91 = sphi 0, %s88
      %s92 = sphi 0, %s91
      %s108 = sphi 0, %s92
      %s114 = sphi 0, %s116
      %s117 = sphi 0, %s114
      %s118 = sphi 0, %s117
      %s134 = sphi 0, %s118
      %s140 = sphi 0, %s142
      %s143 = sphi 0, %s140
      %s144 = sphi 0, %s143
      %s160 = sphi 0, %s144
      %s166 = sphi 0, %s168
      %s169 = sphi 0, %s166
      %s170 = sphi 0, %s169
      %s186 = sphi 0, %s170
      %s192 = sphi 0, %s194
      %s195 = sphi 0, %s192
      %s196 = sphi 0, %s195
      %s212 = sphi 0, %s196
      %s218 = sphi 0, %s220
      %s221 = sphi 0, %s218
      %s222 = sphi 0, %s221
      %s238 = sphi 0, %s222
    $region4: #{tpu_custom_call.1} parent=1 // loop_header_branch
      %17 = sbr.rel (%p15) target = $region8
    $region5: #{tpu_custom_call.1} parent=1 // loop_body
      %s19 = ssub.s32 %s14, 1
      %s20 = ssub.s32 %s14, 2
      %s27 = sadd.s32 1, %s22
      %p28 = scmp.ge.s32.totalorder %s27, 2
      %s29 = scalar_select %p28, 0, %s27
      %s30 = sadd.s32 1, %s21
      %s31 = scalar_select %p28, %s30, %s21
      %p32 = scmp.ge.s32.totalorder %s31, 1
      %s33 = scalar_select %p32, 0, %s31
      %s34 = ssub.s32 %s21, %s33
      %p35 = scmp.eq.s32.totalorder %s34, 0
      %s37 = sadd.s32 %s36, 1
      %s38 = scalar_select %p35, %s36, %s37
      %p41 = pneg %p35
      %p42 = scmp.eq.s32.totalorder %s14, 1
      %p43 = por %p41, %p42
      %p44 = scmp.ne.s32.totalorder %s36, %s39
      %p45 = scmp.eq.s32.totalorder %s14, 0
      %p46 = por %p44, %p45
      %p47 = scmp.ne.s32.totalorder %s36, %s39
      %p48 = scmp.eq.s32.totalorder %s19, 1
      %p49 = por %p47, %p48
      %p50 = scmp.ne.s32.totalorder %s39, %s40
      %p51 = scmp.eq.s32.totalorder %s19, 0
      %p52 = por %p50, %p51
      %p53 = scmp.ne.s32.totalorder %s39, %s40
      %p54 = scmp.eq.s32.totalorder %s20, 1
      %p55 = por %p53, %p54
      %p57 = scmp.ne.s32.totalorder %s40, %s56
      %p58 = scmp.eq.s32.totalorder %s20, 0
      %p59 = por %p57, %p58
      %s60 = ssub.s32 %s22, %s29
      %p61 = scmp.eq.s32.totalorder %s60, 0
      %s63 = sadd.s32 %s62, 1
      %s64 = scalar_select %p61, %s62, %s63
      %p67 = pneg %p61
      %p68 = scmp.eq.s32.totalorder %s14, 1
      %p69 = por %p67, %p68
      %p70 = scmp.ne.s32.totalorder %s62, %s65
      %p71 = scmp.eq.s32.totalorder %s14, 0
      %p72 = por %p70, %p71
      %p73 = scmp.ne.s32.totalorder %s62, %s65
      %p74 = scmp.eq.s32.totalorder %s19, 1
      %p75 = por %p73, %p74
      %p76 = scmp.ne.s32.totalorder %s65, %s66
      %p77 = scmp.eq.s32.totalorder %s19, 0
      %p78 = por %p76, %p77
      %p79 = scmp.ne.s32.totalorder %s65, %s66
      %p80 = scmp.eq.s32.totalorder %s20, 1
      %p81 = por %p79, %p80
      %p83 = scmp.ne.s32.totalorder %s66, %s82
      %p84 = scmp.eq.s32.totalorder %s20, 0
      %p85 = por %p83, %p84
      %s86 = ssub.s32 %s22, %s29
      %p87 = scmp.eq.s32.totalorder %s86, 0
      %s89 = sadd.s32 %s88, 1
      %s90 = scalar_select %p87, %s88, %s89
      %p93 = pneg %p87
      %p94 = scmp.eq.s32.totalorder %s14, 1
      %p95 = por %p93, %p94
      %p96 = scmp.ne.s32.totalorder %s88, %s91
      %p97 = scmp.eq.s32.totalorder %s14, 0
      %p98 = por %p96, %p97
      %p99 = scmp.ne.s32.totalorder %s88, %s91
      %p100 = scmp.eq.s32.totalorder %s19, 1
      %p101 = por %p99, %p100
      %p102 = scmp.ne.s32.totalorder %s91, %s92
      %p103 = scmp.eq.s32.totalorder %s19, 0
      %p104 = por %p102, %p103
      %p105 = scmp.ne.s32.totalorder %s91, %s92
      %p106 = scmp.eq.s32.totalorder %s20, 1
      %p107 = por %p105, %p106
      %p109 = scmp.ne.s32.totalorder %s92, %s108
      %p110 = scmp.eq.s32.totalorder %s20, 0
      %p111 = por %p109, %p110
      %s112 = ssub.s32 %s22, %s29
      %p113 = scmp.eq.s32.totalorder %s112, 0
      %s115 = sadd.s32 %s114, 1
      %s116 = scalar_select %p113, %s114, %s115
      %p119 = pneg %p113
      %p120 = scmp.eq.s32.totalorder %s14, 1
      %p121 = por %p119, %p120
      %p122 = scmp.ne.s32.totalorder %s114, %s117
      %p123 = scmp.eq.s32.totalorder %s14, 0
      %p124 = por %p122, %p123
      %p125 = scmp.ne.s32.totalorder %s114, %s117
      %p126 = scmp.eq.s32.totalorder %s19, 1
      %p127 = por %p125, %p126
      %p128 = scmp.ne.s32.totalorder %s117, %s118
      %p129 = scmp.eq.s32.totalorder %s19, 0
      %p130 = por %p128, %p129
      %p131 = scmp.ne.s32.totalorder %s117, %s118
      %p132 = scmp.eq.s32.totalorder %s20, 1
      %p133 = por %p131, %p132
      %p135 = scmp.ne.s32.totalorder %s118, %s134
      %p136 = scmp.eq.s32.totalorder %s20, 0
      %p137 = por %p135, %p136
      %s138 = ssub.s32 %s22, %s29
      %p139 = scmp.eq.s32.totalorder %s138, 0
      %s141 = sadd.s32 %s140, 1
      %s142 = scalar_select %p139, %s140, %s141
      %p145 = pneg %p139
      %p146 = scmp.eq.s32.totalorder %s14, 1
      %p147 = por %p145, %p146
      %p148 = scmp.ne.s32.totalorder %s140, %s143
      %p149 = scmp.eq.s32.totalorder %s14, 0
      %p150 = por %p148, %p149
      %p151 = scmp.ne.s32.totalorder %s140, %s143
      %p152 = scmp.eq.s32.totalorder %s19, 1
      %p153 = por %p151, %p152
      %p154 = scmp.ne.s32.totalorder %s143, %s144
      %p155 = scmp.eq.s32.totalorder %s19, 0
      %p156 = por %p154, %p155
      %p157 = scmp.ne.s32.totalorder %s143, %s144
      %p158 = scmp.eq.s32.totalorder %s20, 1
      %p159 = por %p157, %p158
      %p161 = scmp.ne.s32.totalorder %s144, %s160
      %p162 = scmp.eq.s32.totalorder %s20, 0
      %p163 = por %p161, %p162
      %s164 = ssub.s32 %s22, %s29
      %p165 = scmp.eq.s32.totalorder %s164, 0
      %s167 = sadd.s32 %s166, 1
      %s168 = scalar_select %p165, %s166, %s167
      %p171 = pneg %p165
      %p172 = scmp.eq.s32.totalorder %s14, 1
      %p173 = por %p171, %p172
      %p174 = scmp.ne.s32.totalorder %s166, %s169
      %p175 = scmp.eq.s32.totalorder %s14, 0
      %p176 = por %p174, %p175
      %p177 = scmp.ne.s32.totalorder %s166, %s169
      %p178 = scmp.eq.s32.totalorder %s19, 1
      %p179 = por %p177, %p178
      %p180 = scmp.ne.s32.totalorder %s169, %s170
      %p181 = scmp.eq.s32.totalorder %s19, 0
      %p182 = por %p180, %p181
      %p183 = scmp.ne.s32.totalorder %s169, %s170
      %p184 = scmp.eq.s32.totalorder %s20, 1
      %p185 = por %p183, %p184
      %p187 = scmp.ne.s32.totalorder %s170, %s186
      %p188 = scmp.eq.s32.totalorder %s20, 0
      %p189 = por %p187, %p188
      %s190 = ssub.s32 %s22, %s29
      %p191 = scmp.eq.s32.totalorder %s190, 0
      %s193 = sadd.s32 %s192, 1
      %s194 = scalar_select %p191, %s192, %s193
      %p197 = pneg %p191
      %p198 = scmp.eq.s32.totalorder %s14, 1
      %p199 = por %p197, %p198
      %p200 = scmp.ne.s32.totalorder %s192, %s195
      %p201 = scmp.eq.s32.totalorder %s14, 0
      %p202 = por %p200, %p201
      %p203 = scmp.ne.s32.totalorder %s192, %s195
      %p204 = scmp.eq.s32.totalorder %s19, 1
      %p205 = por %p203, %p204
      %p206 = scmp.ne.s32.totalorder %s195, %s196
      %p207 = scmp.eq.s32.totalorder %s19, 0
      %p208 = por %p206, %p207
      %p209 = scmp.ne.s32.totalorder %s195, %s196
      %p210 = scmp.eq.s32.totalorder %s20, 1
      %p211 = por %p209, %p210
      %p213 = scmp.ne.s32.totalorder %s196, %s212
      %p214 = scmp.eq.s32.totalorder %s20, 0
      %p215 = por %p213, %p214
      %s216 = ssub.s32 %s21, %s33
      %p217 = scmp.eq.s32.totalorder %s216, 0
      %s219 = sadd.s32 %s218, 1
      %s220 = scalar_select %p217, %s218, %s219
      %p223 = pneg %p217
      %p224 = scmp.eq.s32.totalorder %s14, 1
      %p225 = por %p223, %p224
      %p226 = scmp.ne.s32.totalorder %s218, %s221
      %p227 = scmp.eq.s32.totalorder %s14, 0
      %p228 = por %p226, %p227
      %p229 = scmp.ne.s32.totalorder %s218, %s221
      %p230 = scmp.eq.s32.totalorder %s19, 1
      %p231 = por %p229, %p230
      %p232 = scmp.ne.s32.totalorder %s221, %s222
      %p233 = scmp.eq.s32.totalorder %s19, 0
      %p234 = por %p232, %p233
      %p235 = scmp.ne.s32.totalorder %s221, %s222
      %p236 = scmp.eq.s32.totalorder %s20, 1
      %p237 = por %p235, %p236
      %p239 = scmp.ne.s32.totalorder %s222, %s238
      %p240 = scmp.eq.s32.totalorder %s20, 0
      %p241 = por %p239, %p240
      %p242 = scmp.le.s32.totalorder 1, %s14
      %p243 = scmp.lt.s32.totalorder %s14, 3
      %p244 = pnand %p242, %p243
      %p245 = pneg %p244
      // Predicated region
      $region9: #{tpu_custom_call.1} parent=5 // pred_check
        _
      $region10: #{tpu_custom_call.1} parent=5 // pred_check_branch
        %247 = sbr.rel (%p244) target = $region12
      $region11: #{tpu_custom_call.1} parent=5 // pred_region
        %s248 = ssub.s32 %s14, 1
        // Predicated region
        $region13: #{tpu_custom_call.1} parent=11 // pred_check
          %p249 = pneg %p52
        $region14: #{tpu_custom_call.1} parent=11 // pred_check_branch
          %251 = sbr.rel (%p249) target = $region16
        $region15: #{tpu_custom_call.1} parent=11 // pred_region
          %s252 = smul.u32 2, %s23
          %p253 = scmp.lt.s32.totalorder %s252, 1
          %s254 = scalar_select %p253, %s252, 1
          %s255 = smul.addr %s254, 8
          %s256 = scalar_lea.vmem %s0, %s255
          %s257 = smul.u32 2, %s23
        $region16: #{tpu_custom_call.1} parent=11 // pred_fallthru
          _
      $region12: #{tpu_custom_call.1} parent=5 // pred_fallthru
        _
      %p258 = scmp.lt.s32.totalorder %s14, 2
      // Predicated region
      $region17: #{tpu_custom_call.1} parent=5 // pred_check
        %p259 = pneg %p258
      $region18: #{tpu_custom_call.1} parent=5 // pred_check_branch
        %261 = sbr.rel (%p259) target = $region20
      $region19: #{tpu_custom_call.1} parent=5 // pred_region
        // Predicated region
        $region21: #{tpu_custom_call.1} parent=19 // pred_check
          %p262 = pneg %p72
        $region22: #{tpu_custom_call.1} parent=19 // pred_check_branch
          %264 = sbr.rel (%p262) target = $region24
        $region23: #{tpu_custom_call.1} parent=19 // pred_region
          %p265 = scmp.lt.s32.totalorder %s22, 1
          %s266 = scalar_select %p265, %s22, 1
          %s267 = smul.addr %s266, 8
          %s268 = scalar_lea.vmem %s1, %s267
        $region24: #{tpu_custom_call.1} parent=19 // pred_fallthru
          _
        // Predicated region
        $region25: #{tpu_custom_call.1} parent=19 // pred_check
          %p269 = pneg %p98
        $region26: #{tpu_custom_call.1} parent=19 // pred_check_branch
          %271 = sbr.rel (%p269) target = $region28
        $region27: #{tpu_custom_call.1} parent=19 // pred_region
          %p272 = scmp.lt.s32.totalorder %s22, 1
          %s273 = scalar_select %p272, %s22, 1
          %s274 = smul.addr %s273, 4
          %s275 = smul.addr %s274, 8
          %s276 = scalar_lea.vmem %s2, %s275
        $region28: #{tpu_custom_call.1} parent=19 // pred_fallthru
          _
        // Predicated region
        $region29: #{tpu_custom_call.1} parent=19 // pred_check
          %p277 = pneg %p124
        $region30: #{tpu_custom_call.1} parent=19 // pred_check_branch
          %279 = sbr.rel (%p277) target = $region32
        $region31: #{tpu_custom_call.1} parent=19 // pred_region
          %p280 = scmp.lt.s32.totalorder %s22, 1
          %s281 = scalar_select %p280, %s22, 1
          %s282 = smul.addr %s281, 4
          %s283 = smul.addr %s282, 8
          %s284 = scalar_lea.vmem %s3, %s283
        $region32: #{tpu_custom_call.1} parent=19 // pred_fallthru
          _
        // Predicated region
        $region33: #{tpu_custom_call.1} parent=19 // pred_check
          %p285 = pneg %p150
        $region34: #{tpu_custom_call.1} parent=19 // pred_check_branch
          %287 = sbr.rel (%p285) target = $region36
        $region35: #{tpu_custom_call.1} parent=19 // pred_region
          %p288 = scmp.lt.s32.totalorder %s22, 1
          %s289 = scalar_select %p288, %s22, 1
          %s290 = smul.addr %s289, 4
          %s291 = smul.addr %s290, 8
          %s292 = scalar_lea.vmem %s4, %s291
        $region36: #{tpu_custom_call.1} parent=19 // pred_fallthru
          _
        // Predicated region
        $region37: #{tpu_custom_call.1} parent=19 // pred_check
          %p293 = pneg %p176
        $region38: #{tpu_custom_call.1} parent=19 // pred_check_branch
          %295 = sbr.rel (%p293) target = $region40
        $region39: #{tpu_custom_call.1} parent=19 // pred_region
          %p296 = scmp.lt.s32.totalorder %s22, 1
          %s297 = scalar_select %p296, %s22, 1
          %s298 = scalar_lea.vmem %s5, %s297
        $region40: #{tpu_custom_call.1} parent=19 // pred_fallthru
          _
        // Predicated region
        $region41: #{tpu_custom_call.1} parent=19 // pred_check
          %p299 = pneg %p202
        $region42: #{tpu_custom_call.1} parent=19 // pred_check_branch
          %301 = sbr.rel (%p299) target = $region44
        $region43: #{tpu_custom_call.1} parent=19 // pred_region
          %p302 = scmp.lt.s32.totalorder %s22, 1
          %s303 = scalar_select %p302, %s22, 1
          %s304 = smul.addr %s303, 8
          %s305 = smul.addr %s304, 8
          %s306 = scalar_lea.vmem %s6, %s305
        $region44: #{tpu_custom_call.1} parent=19 // pred_fallthru
          _
      $region20: #{tpu_custom_call.1} parent=5 // pred_fallthru
        _
      %p307 = scmp.le.s32.totalorder 1, %s14
      %p308 = scmp.lt.s32.totalorder %s14, 3
      %p309 = pnand %p307, %p308
      %p310 = pneg %p309
      // Predicated region
      $region45: #{tpu_custom_call.1} parent=5 // pred_check
        _
      $region46: #{tpu_custom_call.1} parent=5 // pred_check_branch
        %312 = sbr.rel (%p309) target = $region48
      $region47: #{tpu_custom_call.1} parent=5 // pred_region
        %s313 = ssub.s32 %s14, 1
        %s314 = smul.u32 2, %s23
        %p315 = scmp.lt.s32.totalorder %s314, 1
        %s316 = scalar_select %p315, %s314, 1
        %s317 = smul.addr %s316, 8
        %s318 = scalar_lea.vmem %s0, %s317
        %p319 = pneg %p52
        %p320 = pneg %p49
        %p321 = scmp.lt.s32.totalorder %s24, 1
        %s322 = scalar_select %p321, %s24, 1
        %s323 = smul.addr %s322, 8
        %s324 = scalar_lea.vmem %s1, %s323
        %p325 = pneg %p78
        %p326 = pneg %p75
        %p327 = scmp.lt.s32.totalorder %s24, 1
        %s328 = scalar_select %p327, %s24, 1
        %s329 = smul.addr %s328, 4
        %s330 = smul.addr %s329, 8
        %s331 = scalar_lea.vmem %s2, %s330
        %p332 = pneg %p104
        %p333 = pneg %p101
        %p334 = scmp.lt.s32.totalorder %s24, 1
        %s335 = scalar_select %p334, %s24, 1
        %s336 = smul.addr %s335, 4
        %s337 = smul.addr %s336, 8
        %s338 = scalar_lea.vmem %s3, %s337
        %p339 = pneg %p130
        %p340 = pneg %p127
        %p341 = scmp.lt.s32.totalorder %s24, 1
        %s342 = scalar_select %p341, %s24, 1
        %s343 = smul.addr %s342, 4
        %s344 = smul.addr %s343, 8
        %s345 = scalar_lea.vmem %s4, %s344
        %p346 = pneg %p156
        %p347 = pneg %p153
        %p348 = scmp.lt.s32.totalorder %s24, 1
        %s349 = scalar_select %p348, %s24, 1
        %s350 = scalar_lea.vmem %s5, %s349
        %p351 = pneg %p182
        %p352 = pneg %p179
        %p353 = scmp.lt.s32.totalorder %s24, 1
        %s354 = scalar_select %p353, %s24, 1
        %s355 = smul.addr %s354, 8
        %s356 = smul.addr %s355, 8
        %s357 = scalar_lea.vmem %s6, %s356
        %p358 = pneg %p208
        %p359 = pneg %p205
        %p360 = pneg %p234
        %p361 = pneg %p231
        %s362 = smul.u32 2, %s23
        %p363 = scmp.lt.s32.totalorder %s362, 1
        %s364 = scalar_select %p363, %s362, 1
        %s365 = smul.addr %s364, 8
        %s366 = scalar_lea.vmem %s0, %s365
        %s367 = smul.u32 2, %s23
        %p368 = scmp.lt.s32.totalorder %s24, 1
        %s369 = scalar_select %p368, %s24, 1
        %s370 = smul.addr %s369, 8
        %s371 = scalar_lea.vmem %s1, %s370
        %p372 = scmp.lt.s32.totalorder %s24, 1
        %s373 = scalar_select %p372, %s24, 1
        %s374 = smul.addr %s373, 4
        %s375 = smul.addr %s374, 8
        %s376 = scalar_lea.vmem %s2, %s375
        %p377 = scmp.lt.s32.totalorder %s24, 1
        %s378 = scalar_select %p377, %s24, 1
        %s379 = smul.addr %s378, 4
        %s380 = smul.addr %s379, 8
        %s381 = scalar_lea.vmem %s3, %s380
        %p382 = scmp.lt.s32.totalorder %s24, 1
        %s383 = scalar_select %p382, %s24, 1
        %s384 = smul.addr %s383, 4
        %s385 = smul.addr %s384, 8
        %s386 = scalar_lea.vmem %s4, %s385
        %p387 = scmp.lt.s32.totalorder %s24, 1
        %s388 = scalar_select %p387, %s24, 1
        %s389 = scalar_lea.vmem %s5, %s388
        %p390 = scmp.lt.s32.totalorder %s24, 1
        %s391 = scalar_select %p390, %s24, 1
        %s392 = smul.addr %s391, 8
        %s393 = smul.addr %s392, 8
        %s394 = scalar_lea.vmem %s6, %s393
        %s395 = smul.u32 2, %s23
        %p397 = scmp.eq.s32.totalorder %s24, 0
        // Predicated region
        $region49: #{tpu_custom_call.1} parent=47 // pred_check
          %p398 = pneg %p397
        $region50: #{tpu_custom_call.1} parent=47 // pred_check_branch
          %400 = sbr.rel (%p398) target = $region52
        $region51: #{tpu_custom_call.1} parent=47 // pred_region
          %v401 = vld [vmem:[%s366] sm:$0xff]
          %v402 = vld [vmem:[%s366 + $0x8] sm:$0xff]
          %vm403 = vcmask 261120
          %404 = vst.msk [vmem:[#allocation3] sm:$0xff] %vm403, %v401
          %405 = vst.msk [vmem:[#allocation3 + $0x8] sm:$0xff] %vm403, %v402
        $region52: #{tpu_custom_call.1} parent=47 // pred_fallthru
          _
        %v406 = vld [vmem:[#allocation3] sm:$0xff]
        %v407 = vld [vmem:[#allocation3 + $0x8] sm:$0xff]
        %v408 = vld [vmem:[%s371] sm:$0x7f]
        %vm409 = vcmask 261120
        %v410 = vsel %vm409, %v406, 0.0
        %411 = vadd.xlane.f32.xlu0 %v410
        %v412 = vpop.xlane.xlu0 %411
        %v413 = vsel %vm409, %v407, 0.0
        %414 = vadd.xlane.f32.xlu0 %v413
        %v415 = vpop.xlane.xlu0 %414
        %v416 = vrcp.pop 32.0
        %v417 = vmul.f32 %v412, %v416
        %v418 = vmul.f32 %v415, %v416
        %v419 = vsub.f32 %v406, %v417
        %v420 = vsub.f32 %v407, %v418
        %v421 = vmul.f32 %v419, %v419
        %v422 = vmul.f32 %v420, %v420
        %v423 = vsel %vm409, %v421, 0.0
        %424 = vadd.xlane.f32.xlu0 %v423
        %v425 = vpop.xlane.xlu0 %424
        %v426 = vsel %vm409, %v422, 0.0
        %427 = vadd.xlane.f32.xlu0 %v426
        %v428 = vpop.xlane.xlu0 %427
        %v429 = vmul.f32 %v425, %v416
        %v430 = vmul.f32 %v428, %v416
        %v431 = vadd.f32 %v429, 1e-05
        %v432 = vadd.f32 %v430, 1e-05
        %v433 = vrsqrt.pop %v431
        %v434 = vrsqrt.pop %v432
        %v435 = vmul.f32 %v419, %v433
        %v436 = vmul.f32 %v420, %v434
        %v437 = vlaneseq
        %v438 = vshrl.u32 %v437, 7
        %v439 = vsub.s32 0, %v438
        %v440 = vrot.slane %v408, %v439
        %v441 = vmul.f32 %v435, %v440
        %v442 = vmul.f32 %v436, %v440
        %v443 = vlaneseq
        %v444 = vshrl.u32 %v443, 7
        %v445 = vsub.s32 1, %v444
        %v446 = vrot.slane %v408, %v445
        %v447 = vadd.f32 %v441, %v446
        %v448 = vadd.f32 %v442, %v446
        %v449 = vsel %vm409, %v447, 0.0
        %450 = vadd.xlane.f32.xlu0 %v449
        %v451 = vpop.xlane.xlu0 %450
        %v452 = vsel %vm409, %v448, 0.0
        %453 = vadd.xlane.f32.xlu0 %v452
        %v454 = vpop.xlane.xlu0 %453
        %v455 = vmul.f32 %v451, %v416
        %v456 = vmul.f32 %v454, %v416
        %v457 = vsub.f32 %v447, %v455
        %v458 = vsub.f32 %v448, %v456
        %v459 = vmul.f32 %v457, %v457
        %v460 = vmul.f32 %v458, %v458
        %v461 = vsel %vm409, %v459, 0.0
        %462 = vadd.xlane.f32.xlu0 %v461
        %v463 = vpop.xlane.xlu0 %462
        %v464 = vsel %vm409, %v460, 0.0
        %465 = vadd.xlane.f32.xlu0 %v464
        %v466 = vpop.xlane.xlu0 %465
        %v467 = vmul.f32 %v463, %v416
        %v468 = vmul.f32 %v466, %v416
        %v469 = vadd.f32 %v467, 1e-05
        %v470 = vadd.f32 %v468, 1e-05
        %v471 = vrsqrt.pop %v469
        %v472 = vrsqrt.pop %v470
        %v473 = vmul.f32 %v457, %v471
        %v474 = vmul.f32 %v458, %v472
        %v475 = vlaneseq
        %v476 = vshrl.u32 %v475, 7
        %v477 = vsub.s32 2, %v476
        %v478 = vrot.slane %v408, %v477
        %v479 = vmul.f32 %v473, %v478
        %v480 = vmul.f32 %v474, %v478
        %v481 = vlaneseq
        %v482 = vshrl.u32 %v481, 7
        %v483 = vsub.s32 3, %v482
        %v484 = vrot.slane %v408, %v483
        %v485 = vadd.f32 %v479, %v484
        %v486 = vadd.f32 %v480, %v484
        %v487 = vpack.c.bf16 %v486, %v485
        %v488 = vld [vmem:[%s376] sm:$0xff]
        %v489 = vld [vmem:[%s376 + $0x8] sm:$0xff]
        %v490 = vld [vmem:[%s376 + $0x10] sm:$0xff]
        %v491 = vld [vmem:[%s376 + $0x18] sm:$0xff]
        %v492 = vpack.c.bf16 %v489, %v488
        %v493 = vpack.c.bf16 %v491, %v490
        %v495 = vsel %vm409, %v487, 0
        %497 = vmatprep.subr.bf16.mxu0 0
        %498 = vmatpush1.bf16.msra.mxu0 0
        %499 = vmatprep.subr.bf16.mxu0 0
        %500 = vmatpush1.bf16.msra.mxu0 0
        %501 = vmatprep.subr.bf16.mxu0 0
        %502 = vmatpush1.bf16.msra.mxu0 0
        %503 = vmatprep.subr.bf16.mxu0 0
        %504 = vmatpush1.bf16.msra.mxu0 0
        %505 = vmatprep.subr.bf16.mxu0 0
        %506 = vmatpush1.bf16.msra.mxu0 0
        %507 = vmatprep.subr.bf16.mxu0 0
        %508 = vmatpush1.bf16.msra.mxu0 0
        %509 = vmatprep.subr.bf16.mxu0 0
        %510 = vmatpush1.bf16.msra.mxu0 %v493
        %511 = vmatprep.subr.bf16.mxu0 0
        %512 = vmatpush1.bf16.msra.mxu0 %v492
        %513 = vmatprep.subr.bf16.mxu0 0
        %514 = vmatpush2.bf16.msra.mxu0 0
        %515 = vmatprep.subr.bf16.mxu0 0
        %516 = vmatpush2.bf16.msra.mxu0 0
        %517 = vmatprep.subr.bf16.mxu0 0
        %518 = vmatpush2.bf16.msra.mxu0 0
        %519 = vmatprep.subr.bf16.mxu0 0
        %520 = vmatpush2.bf16.msra.mxu0 0
        %521 = vmatprep.subr.bf16.mxu0 0
        %522 = vmatpush2.bf16.msra.mxu0 0
        %523 = vmatprep.subr.bf16.mxu0 0
        %524 = vmatpush2.bf16.msra.mxu0 0
        %525 = vmatprep.subr.bf16.mxu0 0
        %526 = vmatpush2.bf16.msra.mxu0 0
        %527 = vmatprep.subr.bf16.mxu0 0
        %528 = vmatpush2.bf16.msra.mxu0 0
        %529 = vmatprep.mubr.bf16.mxu0 0
        %530 = vmatmul.mubr.bf16.gmra.mxu0 %v495
        %v531 = vpop.f32.mrf.mxu0
        %v532 = vadd.f32 0.0, %v531
        %v533 = vpop.f32.mrf.mxu0
        %v534 = vpop.f32.mrf.mxu0
        %v535 = vadd.f32 0.0, %v534
        %v536 = vpop.f32.mrf.mxu0
        %537 = vdwg.mxu0
        %v538 = vpack.c.bf16 %v532, %v532
        %v539 = vpack.c.bf16 %v535, %v535
        %541 = vrot.lane.b32.xlu0 %v538, 96
        %v542 = vpop.permute.xlu0 %541
        %vm543 = vcmask 130048
        %v545 = vsel %vm543, %v538, 0
        %v548 = vsel %vm543, %v542, 0
        %550 = vmatprep.subr.bf16.mxu0 0
        %551 = vmatpush1.bf16.xpose.msra.mxu0 0
        %552 = vmatprep.subr.bf16.mxu0 0
        %553 = vmatpush1.bf16.xpose.msra.mxu0 0
        %554 = vmatprep.subr.bf16.mxu0 0
        %555 = vmatpush1.bf16.xpose.msra.mxu0 0
        %556 = vmatprep.subr.bf16.mxu0 0
        %557 = vmatpush1.bf16.xpose.msra.mxu0 0
        %558 = vmatprep.subr.bf16.mxu0 0
        %559 = vmatpush1.bf16.xpose.msra.mxu0 0
        %560 = vmatprep.subr.bf16.mxu0 0
        %561 = vmatpush1.bf16.xpose.msra.mxu0 0
        %562 = vmatprep.subr.bf16.mxu0 0
        %563 = vmatpush1.bf16.xpose.msra.mxu0 0
        %564 = vmatprep.subr.bf16.mxu0 0
        %565 = vmatpush1.bf16.xpose.msra.mxu0 %v548
        %566 = vmatprep.subr.bf16.mxu0 0
        %567 = vmatpush2.bf16.xpose.msra.mxu0 0
        %568 = vmatprep.subr.bf16.mxu0 0
        %569 = vmatpush2.bf16.xpose.msra.mxu0 0
        %570 = vmatprep.subr.bf16.mxu0 0
        %571 = vmatpush2.bf16.xpose.msra.mxu0 0
        %572 = vmatprep.subr.bf16.mxu0 0
        %573 = vmatpush2.bf16.xpose.msra.mxu0 0
        %574 = vmatprep.subr.bf16.mxu0 0
        %575 = vmatpush2.bf16.xpose.msra.mxu0 0
        %576 = vmatprep.subr.bf16.mxu0 0
        %577 = vmatpush2.bf16.xpose.msra.mxu0 0
        %578 = vmatprep.subr.bf16.mxu0 0
        %579 = vmatpush2.bf16.xpose.msra.mxu0 0
        %580 = vmatprep.subr.bf16.mxu0 0
        %581 = vmatpush2.bf16.xpose.msra.mxu0 0
        %582 = vmatprep.mubr.bf16.mxu0 0
        %583 = vmatmul.mubr.bf16.gmra.mxu0 %v545
        %v584 = vpop.f32.mrf.mxu0
        %v585 = vadd.f32 0.0, %v584
        %v586 = vpop.f32.mrf.mxu0
        %v587 = vpop.f32.mrf.mxu0
        %v588 = vpop.f32.mrf.mxu0
        %589 = vdwg.mxu0
        %591 = vrot.lane.b32.xlu0 %v539, 96
        %v592 = vpop.permute.xlu0 %591
        %v594 = vsel %vm543, %v539, 0
        %v597 = vsel %vm543, %v592, 0
        %599 = vmatprep.subr.bf16.mxu0 0
        %600 = vmatpush1.bf16.xpose.msra.mxu0 0
        %601 = vmatprep.subr.bf16.mxu0 0
        %602 = vmatpush1.bf16.xpose.msra.mxu0 0
        %603 = vmatprep.subr.bf16.mxu0 0
        %604 = vmatpush1.bf16.xpose.msra.mxu0 0
        %605 = vmatprep.subr.bf16.mxu0 0
        %606 = vmatpush1.bf16.xpose.msra.mxu0 0
        %607 = vmatprep.subr.bf16.mxu0 0
        %608 = vmatpush1.bf16.xpose.msra.mxu0 0
        %609 = vmatprep.subr.bf16.mxu0 0
        %610 = vmatpush1.bf16.xpose.msra.mxu0 0
        %611 = vmatprep.subr.bf16.mxu0 0
        %612 = vmatpush1.bf16.xpose.msra.mxu0 0
        %613 = vmatprep.subr.bf16.mxu0 0
        %614 = vmatpush1.bf16.xpose.msra.mxu0 %v597
        %615 = vmatprep.subr.bf16.mxu0 0
        %616 = vmatpush2.bf16.xpose.msra.mxu0 0
        %617 = vmatprep.subr.bf16.mxu0 0
        %618 = vmatpush2.bf16.xpose.msra.mxu0 0
        %619 = vmatprep.subr.bf16.mxu0 0
        %620 = vmatpush2.bf16.xpose.msra.mxu0 0
        %621 = vmatprep.subr.bf16.mxu0 0
        %622 = vmatpush2.bf16.xpose.msra.mxu0 0
        %623 = vmatprep.subr.bf16.mxu0 0
        %624 = vmatpush2.bf16.xpose.msra.mxu0 0
        %625 = vmatprep.subr.bf16.mxu0 0
        %626 = vmatpush2.bf16.xpose.msra.mxu0 0
        %627 = vmatprep.subr.bf16.mxu0 0
        %628 = vmatpush2.bf16.xpose.msra.mxu0 0
        %629 = vmatprep.subr.bf16.mxu0 0
        %630 = vmatpush2.bf16.xpose.msra.mxu0 0
        %631 = vmatprep.mubr.bf16.mxu0 0
        %632 = vmatmul.mubr.bf16.gmra.mxu0 %v594
        %v633 = vpop.f32.mrf.mxu0
        %v634 = vadd.f32 0.0, %v633
        %v635 = vpop.f32.mrf.mxu0
        %v636 = vpop.f32.mrf.mxu0
        %v637 = vpop.f32.mrf.mxu0
        %638 = vdwg.mxu0
        %vm639 = vcmask 64512
        %v640 = vsel %vm639, %v585, -inf
        %641 = vmax.xlane.f32.xlu0 %v640
        %v642 = vpop.xlane.xlu0 %641
        %v643 = vsel %vm639, %v634, -inf
        %644 = vmax.xlane.f32.xlu0 %v643
        %v645 = vpop.xlane.xlu0 %644
        %v646 = vsub.f32 %v585, %v642
        %v647 = vsub.f32 %v634, %v645
        %v648 = vmul.f32 %v646, 1.442695
        %v649 = vpow.pop %v648
        %v650 = vmul.f32 %v647, 1.442695
        %v651 = vpow.pop %v650
        %v652 = vsel %vm639, %v649, 0.0
        %653 = vadd.xlane.f32.xlu0 %v652
        %v654 = vpop.xlane.xlu0 %653
        %v655 = vsel %vm639, %v651, 0.0
        %656 = vadd.xlane.f32.xlu0 %v655
        %v657 = vpop.xlane.xlu0 %656
        %v658 = vrcp.pop %v654
        %v659 = vrcp.pop %v657
        %v660 = vmul.f32 %v649, %v658
        %v661 = vmul.f32 %v651, %v659
        %v662 = vpack.c.bf16 %v660, %v660
        %v663 = vpack.c.bf16 %v661, %v661
        %664 = vrot.lane.b32.xlu0 %v538, 64
        %v665 = vpop.permute.xlu0 %664
        %v667 = vsel %vm639, %v662, 0
        %vm669 = vcmask 1043456
        %v671 = vsel %vm669, %v665, 0
        %673 = vmatprep.subr.bf16.mxu0 0
        %674 = vmatpush1.bf16.msra.mxu0 0
        %675 = vmatprep.subr.bf16.mxu0 0
        %676 = vmatpush1.bf16.msra.mxu0 0
        %677 = vmatprep.subr.bf16.mxu0 0
        %678 = vmatpush1.bf16.msra.mxu0 0
        %679 = vmatprep.subr.bf16.mxu0 0
        %680 = vmatpush1.bf16.msra.mxu0 0
        %681 = vmatprep.subr.bf16.mxu0 0
        %682 = vmatpush1.bf16.msra.mxu0 0
        %683 = vmatprep.subr.bf16.mxu0 0
        %684 = vmatpush1.bf16.msra.mxu0 0
        %685 = vmatprep.subr.bf16.mxu0 0
        %686 = vmatpush1.bf16.msra.mxu0 0
        %687 = vmatprep.subr.bf16.mxu0 0
        %688 = vmatpush1.bf16.msra.mxu0 %v671
        %689 = vmatprep.subr.bf16.mxu0 0
        %690 = vmatpush2.bf16.msra.mxu0 0
        %691 = vmatprep.subr.bf16.mxu0 0
        %692 = vmatpush2.bf16.msra.mxu0 0
        %693 = vmatprep.subr.bf16.mxu0 0
        %694 = vmatpush2.bf16.msra.mxu0 0
        %695 = vmatprep.subr.bf16.mxu0 0
        %696 = vmatpush2.bf16.msra.mxu0 0
        %697 = vmatprep.subr.bf16.mxu0 0
        %698 = vmatpush2.bf16.msra.mxu0 0
        %699 = vmatprep.subr.bf16.mxu0 0
        %700 = vmatpush2.bf16.msra.mxu0 0
        %701 = vmatprep.subr.bf16.mxu0 0
        %702 = vmatpush2.bf16.msra.mxu0 0
        %703 = vmatprep.subr.bf16.mxu0 0
        %704 = vmatpush2.bf16.msra.mxu0 0
        %705 = vmatprep.mubr.bf16.mxu0 0
        %706 = vmatmul.mubr.bf16.gmra.mxu0 %v667
        %v707 = vpop.f32.mrf.mxu0
        %v708 = vadd.f32 0.0, %v707
        %v709 = vpop.f32.mrf.mxu0
        %v710 = vpop.f32.mrf.mxu0
        %v711 = vpop.f32.mrf.mxu0
        %712 = vdwg.mxu0
        %713 = vrot.lane.b32.xlu0 %v539, 64
        %v714 = vpop.permute.xlu0 %713
        %v716 = vsel %vm639, %v663, 0
        %v719 = vsel %vm669, %v714, 0
        %721 = vmatprep.subr.bf16.mxu0 0
        %722 = vmatpush1.bf16.msra.mxu0 0
        %723 = vmatprep.subr.bf16.mxu0 0
        %724 = vmatpush1.bf16.msra.mxu0 0
        %725 = vmatprep.subr.bf16.mxu0 0
        %726 = vmatpush1.bf16.msra.mxu0 0
        %727 = vmatprep.subr.bf16.mxu0 0
        %728 = vmatpush1.bf16.msra.mxu0 0
        %729 = vmatprep.subr.bf16.mxu0 0
        %730 = vmatpush1.bf16.msra.mxu0 0
        %731 = vmatprep.subr.bf16.mxu0 0
        %732 = vmatpush1.bf16.msra.mxu0 0
        %733 = vmatprep.subr.bf16.mxu0 0
        %734 = vmatpush1.bf16.msra.mxu0 0
        %735 = vmatprep.subr.bf16.mxu0 0
        %736 = vmatpush1.bf16.msra.mxu0 %v719
        %737 = vmatprep.subr.bf16.mxu0 0
        %738 = vmatpush2.bf16.msra.mxu0 0
        %739 = vmatprep.subr.bf16.mxu0 0
        %740 = vmatpush2.bf16.msra.mxu0 0
        %741 = vmatprep.subr.bf16.mxu0 0
        %742 = vmatpush2.bf16.msra.mxu0 0
        %743 = vmatprep.subr.bf16.mxu0 0
        %744 = vmatpush2.bf16.msra.mxu0 0
        %745 = vmatprep.subr.bf16.mxu0 0
        %746 = vmatpush2.bf16.msra.mxu0 0
        %747 = vmatprep.subr.bf16.mxu0 0
        %748 = vmatpush2.bf16.msra.mxu0 0
        %749 = vmatprep.subr.bf16.mxu0 0
        %750 = vmatpush2.bf16.msra.mxu0 0
        %751 = vmatprep.subr.bf16.mxu0 0
        %752 = vmatpush2.bf16.msra.mxu0 0
        %753 = vmatprep.mubr.bf16.mxu0 0
        %754 = vmatmul.mubr.bf16.gmra.mxu0 %v716
        %v755 = vpop.f32.mrf.mxu0
        %v756 = vadd.f32 0.0, %v755
        %v757 = vpop.f32.mrf.mxu0
        %v758 = vpop.f32.mrf.mxu0
        %v759 = vpop.f32.mrf.mxu0
        %760 = vdwg.mxu0
        %761 = vst.msk [vmem:[#allocation2] sm:$0xff] %vm543, %v708
        %762 = vst.msk [vmem:[#allocation2 + $0x8] sm:$0xff] %vm543, %v756
        %763 = vrot.lane.b32.xlu0 %v538, 112
        %v764 = vpop.permute.xlu0 %763
        %765 = vrot.lane.b32.xlu0 %v538, 80
        %v766 = vpop.permute.xlu0 %765
        %v768 = vsel %vm543, %v764, 0
        %v771 = vsel %vm543, %v766, 0
        %773 = vmatprep.subr.bf16.mxu0 0
        %774 = vmatpush1.bf16.xpose.msra.mxu0 0
        %775 = vmatprep.subr.bf16.mxu0 0
        %776 = vmatpush1.bf16.xpose.msra.mxu0 0
        %777 = vmatprep.subr.bf16.mxu0 0
        %778 = vmatpush1.bf16.xpose.msra.mxu0 0
        %779 = vmatprep.subr.bf16.mxu0 0
        %780 = vmatpush1.bf16.xpose.msra.mxu0 0
        %781 = vmatprep.subr.bf16.mxu0 0
        %782 = vmatpush1.bf16.xpose.msra.mxu0 0
        %783 = vmatprep.subr.bf16.mxu0 0
        %784 = vmatpush1.bf16.xpose.msra.mxu0 0
        %785 = vmatprep.subr.bf16.mxu0 0
        %786 = vmatpush1.bf16.xpose.msra.mxu0 0
        %787 = vmatprep.subr.bf16.mxu0 0
        %788 = vmatpush1.bf16.xpose.msra.mxu0 %v771
        %789 = vmatprep.subr.bf16.mxu0 0
        %790 = vmatpush2.bf16.xpose.msra.mxu0 0
        %791 = vmatprep.subr.bf16.mxu0 0
        %792 = vmatpush2.bf16.xpose.msra.mxu0 0
        %793 = vmatprep.subr.bf16.mxu0 0
        %794 = vmatpush2.bf16.xpose.msra.mxu0 0
        %795 = vmatprep.subr.bf16.mxu0 0
        %796 = vmatpush2.bf16.xpose.msra.mxu0 0
        %797 = vmatprep.subr.bf16.mxu0 0
        %798 = vmatpush2.bf16.xpose.msra.mxu0 0
        %799 = vmatprep.subr.bf16.mxu0 0
        %800 = vmatpush2.bf16.xpose.msra.mxu0 0
        %801 = vmatprep.subr.bf16.mxu0 0
        %802 = vmatpush2.bf16.xpose.msra.mxu0 0
        %803 = vmatprep.subr.bf16.mxu0 0
        %804 = vmatpush2.bf16.xpose.msra.mxu0 0
        %805 = vmatprep.mubr.bf16.mxu0 0
        %806 = vmatmul.mubr.bf16.gmra.mxu0 %v768
        %v807 = vpop.f32.mrf.mxu0
        %v808 = vadd.f32 0.0, %v807
        %v809 = vpop.f32.mrf.mxu0
        %v810 = vpop.f32.mrf.mxu0
        %v811 = vpop.f32.mrf.mxu0
        %812 = vdwg.mxu0
        %813 = vrot.lane.b32.xlu0 %v539, 112
        %v814 = vpop.permute.xlu0 %813
        %815 = vrot.lane.b32.xlu0 %v539, 80
        %v816 = vpop.permute.xlu0 %815
        %v818 = vsel %vm543, %v814, 0
        %v821 = vsel %vm543, %v816, 0
        %823 = vmatprep.subr.bf16.mxu0 0
        %824 = vmatpush1.bf16.xpose.msra.mxu0 0
        %825 = vmatprep.subr.bf16.mxu0 0
        %826 = vmatpush1.bf16.xpose.msra.mxu0 0
        %827 = vmatprep.subr.bf16.mxu0 0
        %828 = vmatpush1.bf16.xpose.msra.mxu0 0
        %829 = vmatprep.subr.bf16.mxu0 0
        %830 = vmatpush1.bf16.xpose.msra.mxu0 0
        %831 = vmatprep.subr.bf16.mxu0 0
        %832 = vmatpush1.bf16.xpose.msra.mxu0 0
        %833 = vmatprep.subr.bf16.mxu0 0
        %834 = vmatpush1.bf16.xpose.msra.mxu0 0
        %835 = vmatprep.subr.bf16.mxu0 0
        %836 = vmatpush1.bf16.xpose.msra.mxu0 0
        %837 = vmatprep.subr.bf16.mxu0 0
        %838 = vmatpush1.bf16.xpose.msra.mxu0 %v821
        %839 = vmatprep.subr.bf16.mxu0 0
        %840 = vmatpush2.bf16.xpose.msra.mxu0 0
        %841 = vmatprep.subr.bf16.mxu0 0
        %842 = vmatpush2.bf16.xpose.msra.mxu0 0
        %843 = vmatprep.subr.bf16.mxu0 0
        %844 = vmatpush2.bf16.xpose.msra.mxu0 0
        %845 = vmatprep.subr.bf16.mxu0 0
        %846 = vmatpush2.bf16.xpose.msra.mxu0 0
        %847 = vmatprep.subr.bf16.mxu0 0
        %848 = vmatpush2.bf16.xpose.msra.mxu0 0
        %849 = vmatprep.subr.bf16.mxu0 0
        %850 = vmatpush2.bf16.xpose.msra.mxu0 0
        %851 = vmatprep.subr.bf16.mxu0 0
        %852 = vmatpush2.bf16.xpose.msra.mxu0 0
        %853 = vmatprep.subr.bf16.mxu0 0
        %854 = vmatpush2.bf16.xpose.msra.mxu0 0
        %855 = vmatprep.mubr.bf16.mxu0 0
        %856 = vmatmul.mubr.bf16.gmra.mxu0 %v818
        %v857 = vpop.f32.mrf.mxu0
        %v858 = vadd.f32 0.0, %v857
        %v859 = vpop.f32.mrf.mxu0
        %v860 = vpop.f32.mrf.mxu0
        %v861 = vpop.f32.mrf.mxu0
        %862 = vdwg.mxu0
        %v863 = vsel %vm639, %v808, -inf
        %864 = vmax.xlane.f32.xlu0 %v863
        %v865 = vpop.xlane.xlu0 %864
        %v866 = vsel %vm639, %v858, -inf
        %867 = vmax.xlane.f32.xlu0 %v866
        %v868 = vpop.xlane.xlu0 %867
        %v869 = vsub.f32 %v808, %v865
        %v870 = vsub.f32 %v858, %v868
        %v871 = vmul.f32 %v869, 1.442695
        %v872 = vpow.pop %v871
        %v873 = vmul.f32 %v870, 1.442695
        %v874 = vpow.pop %v873
        %v875 = vsel %vm639, %v872, 0.0
        %876 = vadd.xlane.f32.xlu0 %v875
        %v877 = vpop.xlane.xlu0 %876
        %v878 = vsel %vm639, %v874, 0.0
        %879 = vadd.xlane.f32.xlu0 %v878
        %v880 = vpop.xlane.xlu0 %879
        %v881 = vrcp.pop %v877
        %v882 = vrcp.pop %v880
        %v883 = vmul.f32 %v872, %v881
        %v884 = vmul.f32 %v874, %v882
        %v885 = vpack.c.bf16 %v883, %v883
        %v886 = vpack.c.bf16 %v884, %v884
        %887 = vrot.lane.b32.xlu0 %v538, 48
        %v888 = vpop.permute.xlu0 %887
        %v890 = vsel %vm639, %v885, 0
        %v893 = vsel %vm669, %v888, 0
        %895 = vmatprep.subr.bf16.mxu0 0
        %896 = vmatpush1.bf16.msra.mxu0 0
        %897 = vmatprep.subr.bf16.mxu0 0
        %898 = vmatpush1.bf16.msra.mxu0 0
        %899 = vmatprep.subr.bf16.mxu0 0
        %900 = vmatpush1.bf16.msra.mxu0 0
        %901 = vmatprep.subr.bf16.mxu0 0
        %902 = vmatpush1.bf16.msra.mxu0 0
        %903 = vmatprep.subr.bf16.mxu0 0
        %904 = vmatpush1.bf16.msra.mxu0 0
        %905 = vmatprep.subr.bf16.mxu0 0
        %906 = vmatpush1.bf16.msra.mxu0 0
        %907 = vmatprep.subr.bf16.mxu0 0
        %908 = vmatpush1.bf16.msra.mxu0 0
        %909 = vmatprep.subr.bf16.mxu0 0
        %910 = vmatpush1.bf16.msra.mxu0 %v893
        %911 = vmatprep.subr.bf16.mxu0 0
        %912 = vmatpush2.bf16.msra.mxu0 0
        %913 = vmatprep.subr.bf16.mxu0 0
        %914 = vmatpush2.bf16.msra.mxu0 0
        %915 = vmatprep.subr.bf16.mxu0 0
        %916 = vmatpush2.bf16.msra.mxu0 0
        %917 = vmatprep.subr.bf16.mxu0 0
        %918 = vmatpush2.bf16.msra.mxu0 0
        %919 = vmatprep.subr.bf16.mxu0 0
        %920 = vmatpush2.bf16.msra.mxu0 0
        %921 = vmatprep.subr.bf16.mxu0 0
        %922 = vmatpush2.bf16.msra.mxu0 0
        %923 = vmatprep.subr.bf16.mxu0 0
        %924 = vmatpush2.bf16.msra.mxu0 0
        %925 = vmatprep.subr.bf16.mxu0 0
        %926 = vmatpush2.bf16.msra.mxu0 0
        %927 = vmatprep.mubr.bf16.mxu0 0
        %928 = vmatmul.mubr.bf16.gmra.mxu0 %v890
        %v929 = vpop.f32.mrf.mxu0
        %v930 = vadd.f32 0.0, %v929
        %v931 = vpop.f32.mrf.mxu0
        %v932 = vpop.f32.mrf.mxu0
        %v933 = vpop.f32.mrf.mxu0
        %934 = vdwg.mxu0
        %935 = vrot.lane.b32.xlu0 %v539, 48
        %v936 = vpop.permute.xlu0 %935
        %v938 = vsel %vm639, %v886, 0
        %v941 = vsel %vm669, %v936, 0
        %943 = vmatprep.subr.bf16.mxu0 0
        %944 = vmatpush1.bf16.msra.mxu0 0
        %945 = vmatprep.subr.bf16.mxu0 0
        %946 = vmatpush1.bf16.msra.mxu0 0
        %947 = vmatprep.subr.bf16.mxu0 0
        %948 = vmatpush1.bf16.msra.mxu0 0
        %949 = vmatprep.subr.bf16.mxu0 0
        %950 = vmatpush1.bf16.msra.mxu0 0
        %951 = vmatprep.subr.bf16.mxu0 0
        %952 = vmatpush1.bf16.msra.mxu0 0
        %953 = vmatprep.subr.bf16.mxu0 0
        %954 = vmatpush1.bf16.msra.mxu0 0
        %955 = vmatprep.subr.bf16.mxu0 0
        %956 = vmatpush1.bf16.msra.mxu0 0
        %957 = vmatprep.subr.bf16.mxu0 0
        %958 = vmatpush1.bf16.msra.mxu0 %v941
        %959 = vmatprep.subr.bf16.mxu0 0
        %960 = vmatpush2.bf16.msra.mxu0 0
        %961 = vmatprep.subr.bf16.mxu0 0
        %962 = vmatpush2.bf16.msra.mxu0 0
        %963 = vmatprep.subr.bf16.mxu0 0
        %964 = vmatpush2.bf16.msra.mxu0 0
        %965 = vmatprep.subr.bf16.mxu0 0
        %966 = vmatpush2.bf16.msra.mxu0 0
        %967 = vmatprep.subr.bf16.mxu0 0
        %968 = vmatpush2.bf16.msra.mxu0 0
        %969 = vmatprep.subr.bf16.mxu0 0
        %970 = vmatpush2.bf16.msra.mxu0 0
        %971 = vmatprep.subr.bf16.mxu0 0
        %972 = vmatpush2.bf16.msra.mxu0 0
        %973 = vmatprep.subr.bf16.mxu0 0
        %974 = vmatpush2.bf16.msra.mxu0 0
        %975 = vmatprep.mubr.bf16.mxu0 0
        %976 = vmatmul.mubr.bf16.gmra.mxu0 %v938
        %v977 = vpop.f32.mrf.mxu0
        %v978 = vadd.f32 0.0, %v977
        %v979 = vpop.f32.mrf.mxu0
        %v980 = vpop.f32.mrf.mxu0
        %v981 = vpop.f32.mrf.mxu0
        %982 = vdwg.mxu0
        %985 = vrot.lane.b32.xlu0 %v930, 16
        %v986 = vpop.permute.xlu0 %985
        %987 = vrot.lane.b32.xlu0 %v978, 16
        %v988 = vpop.permute.xlu0 %987
        %vm991 = vcmask 261248
        %992 = vst.msk [vmem:[#allocation2] sm:$0xff] %vm991, %v986
        %993 = vst.msk [vmem:[#allocation2 + $0x8] sm:$0xff] %vm991, %v988
        %v994 = vld [vmem:[#allocation2] sm:$0xff]
        %v995 = vld [vmem:[#allocation2 + $0x8] sm:$0xff]
        %v996 = vpack.c.bf16 %v995, %v994
        %v997 = vld [vmem:[%s381] sm:$0xff]
        %v998 = vld [vmem:[%s381 + $0x8] sm:$0xff]
        %v999 = vld [vmem:[%s381 + $0x10] sm:$0xff]
        %v1000 = vld [vmem:[%s381 + $0x18] sm:$0xff]
        %v1001 = vpack.c.bf16 %v998, %v997
        %v1002 = vpack.c.bf16 %v1000, %v999
        %v1004 = vsel %vm409, %v996, 0
        %1006 = vmatprep.subr.bf16.mxu0 0
        %1007 = vmatpush1.bf16.msra.mxu0 0
        %1008 = vmatprep.subr.bf16.mxu0 0
        %1009 = vmatpush1.bf16.msra.mxu0 0
        %1010 = vmatprep.subr.bf16.mxu0 0
        %1011 = vmatpush1.bf16.msra.mxu0 0
        %1012 = vmatprep.subr.bf16.mxu0 0
        %1013 = vmatpush1.bf16.msra.mxu0 0
        %1014 = vmatprep.subr.bf16.mxu0 0
        %1015 = vmatpush1.bf16.msra.mxu0 0
        %1016 = vmatprep.subr.bf16.mxu0 0
        %1017 = vmatpush1.bf16.msra.mxu0 0
        %1018 = vmatprep.subr.bf16.mxu0 0
        %1019 = vmatpush1.bf16.msra.mxu0 %v1002
        %1020 = vmatprep.subr.bf16.mxu0 0
        %1021 = vmatpush1.bf16.msra.mxu0 %v1001
        %1022 = vmatprep.subr.bf16.mxu0 0
        %1023 = vmatpush2.bf16.msra.mxu0 0
        %1024 = vmatprep.subr.bf16.mxu0 0
        %1025 = vmatpush2.bf16.msra.mxu0 0
        %1026 = vmatprep.subr.bf16.mxu0 0
        %1027 = vmatpush2.bf16.msra.mxu0 0
        %1028 = vmatprep.subr.bf16.mxu0 0
        %1029 = vmatpush2.bf16.msra.mxu0 0
        %1030 = vmatprep.subr.bf16.mxu0 0
        %1031 = vmatpush2.bf16.msra.mxu0 0
        %1032 = vmatprep.subr.bf16.mxu0 0
        %1033 = vmatpush2.bf16.msra.mxu0 0
        %1034 = vmatprep.subr.bf16.mxu0 0
        %1035 = vmatpush2.bf16.msra.mxu0 0
        %1036 = vmatprep.subr.bf16.mxu0 0
        %1037 = vmatpush2.bf16.msra.mxu0 0
        %1038 = vmatprep.mubr.bf16.mxu0 0
        %1039 = vmatmul.mubr.bf16.gmra.mxu0 %v1004
        %v1040 = vpop.f32.mrf.mxu0
        %v1041 = vadd.f32 0.0, %v1040
        %v1042 = vpop.f32.mrf.mxu0
        %v1043 = vpop.f32.mrf.mxu0
        %v1044 = vadd.f32 0.0, %v1043
        %v1045 = vpop.f32.mrf.mxu0
        %1046 = vdwg.mxu0
        %v1047 = vadd.f32 %v406, %v1041
        %v1048 = vadd.f32 %v407, %v1044
        %v1049 = vsel %vm409, %v1047, 0.0
        %1050 = vadd.xlane.f32.xlu0 %v1049
        %v1051 = vpop.xlane.xlu0 %1050
        %v1052 = vsel %vm409, %v1048, 0.0
        %1053 = vadd.xlane.f32.xlu0 %v1052
        %v1054 = vpop.xlane.xlu0 %1053
        %v1055 = vmul.f32 %v1051, %v416
        %v1056 = vmul.f32 %v1054, %v416
        %v1057 = vsub.f32 %v1047, %v1055
        %v1058 = vsub.f32 %v1048, %v1056
        %v1059 = vmul.f32 %v1057, %v1057
        %v1060 = vmul.f32 %v1058, %v1058
        %v1061 = vsel %vm409, %v1059, 0.0
        %1062 = vadd.xlane.f32.xlu0 %v1061
        %v1063 = vpop.xlane.xlu0 %1062
        %v1064 = vsel %vm409, %v1060, 0.0
        %1065 = vadd.xlane.f32.xlu0 %v1064
        %v1066 = vpop.xlane.xlu0 %1065
        %v1067 = vmul.f32 %v1063, %v416
        %v1068 = vmul.f32 %v1066, %v416
        %v1069 = vadd.f32 %v1067, 1e-05
        %v1070 = vadd.f32 %v1068, 1e-05
        %v1071 = vrsqrt.pop %v1069
        %v1072 = vrsqrt.pop %v1070
        %v1073 = vmul.f32 %v1057, %v1071
        %v1074 = vmul.f32 %v1058, %v1072
        %v1075 = vlaneseq
        %v1076 = vshrl.u32 %v1075, 7
        %v1077 = vsub.s32 4, %v1076
        %v1078 = vrot.slane %v408, %v1077
        %v1079 = vmul.f32 %v1073, %v1078
        %v1080 = vmul.f32 %v1074, %v1078
        %v1081 = vlaneseq
        %v1082 = vshrl.u32 %v1081, 7
        %v1083 = vsub.s32 5, %v1082
        %v1084 = vrot.slane %v408, %v1083
        %v1085 = vadd.f32 %v1079, %v1084
        %v1086 = vadd.f32 %v1080, %v1084
        %v1087 = vpack.c.bf16 %v1086, %v1085
        %v1088 = vld [vmem:[%s386] sm:$0xff]
        %v1089 = vld [vmem:[%s386 + $0x8] sm:$0xff]
        %v1090 = vld [vmem:[%s386 + $0x10] sm:$0xff]
        %v1091 = vld [vmem:[%s386 + $0x18] sm:$0xff]
        %v1092 = vpack.c.bf16 %v1089, %v1088
        %v1093 = vpack.c.bf16 %v1091, %v1090
        %v1094 = vld [vmem:[%s389] sm:$0x1]
        %v1096 = vlaneseq
        %v1097 = vshrl.u32 %v1096, 7
        %v1098 = vsub.s32 0, %v1097
        %v1099 = vrot.slane %v1094, %v1098
        %v1102 = vsel %vm409, %v1087, 0
        %1104 = vmatprep.subr.bf16.mxu0 0
        %1105 = vmatpush1.bf16.msra.mxu0 0
        %1106 = vmatprep.subr.bf16.mxu0 0
        %1107 = vmatpush1.bf16.msra.mxu0 0
        %1108 = vmatprep.subr.bf16.mxu0 0
        %1109 = vmatpush1.bf16.msra.mxu0 0
        %1110 = vmatprep.subr.bf16.mxu0 0
        %1111 = vmatpush1.bf16.msra.mxu0 0
        %1112 = vmatprep.subr.bf16.mxu0 0
        %1113 = vmatpush1.bf16.msra.mxu0 0
        %1114 = vmatprep.subr.bf16.mxu0 0
        %1115 = vmatpush1.bf16.msra.mxu0 0
        %1116 = vmatprep.subr.bf16.mxu0 0
        %1117 = vmatpush1.bf16.msra.mxu0 %v1093
        %1118 = vmatprep.subr.bf16.mxu0 0
        %1119 = vmatpush1.bf16.msra.mxu0 %v1092
        %1120 = vmatprep.subr.bf16.mxu0 0
        %1121 = vmatpush2.bf16.msra.mxu0 0
        %1122 = vmatprep.subr.bf16.mxu0 0
        %1123 = vmatpush2.bf16.msra.mxu0 0
        %1124 = vmatprep.subr.bf16.mxu0 0
        %1125 = vmatpush2.bf16.msra.mxu0 0
        %1126 = vmatprep.subr.bf16.mxu0 0
        %1127 = vmatpush2.bf16.msra.mxu0 0
        %1128 = vmatprep.subr.bf16.mxu0 0
        %1129 = vmatpush2.bf16.msra.mxu0 0
        %1130 = vmatprep.subr.bf16.mxu0 0
        %1131 = vmatpush2.bf16.msra.mxu0 0
        %1132 = vmatprep.subr.bf16.mxu0 0
        %1133 = vmatpush2.bf16.msra.mxu0 0
        %1134 = vmatprep.subr.bf16.mxu0 0
        %1135 = vmatpush2.bf16.msra.mxu0 0
        %1136 = vmatprep.mubr.bf16.mxu0 0
        %1137 = vmatmul.mubr.bf16.gmra.mxu0 %v1102
        %v1138 = vpop.f32.mrf.mxu0
        %v1139 = vadd.f32 %v1099, %v1138
        %v1140 = vpop.f32.mrf.mxu0
        %v1141 = vpop.f32.mrf.mxu0
        %v1142 = vadd.f32 %v1099, %v1141
        %v1143 = vpop.f32.mrf.mxu0
        %1144 = vdwg.mxu0
        %v1145 = vmul.f32 %v1139, 0.5
        %v1146 = vmul.f32 %v1142, 0.5
        %v1147 = vmul.f32 %v1139, 0.70710677
        %v1148 = vmul.f32 %v1142, 0.70710677
        %v1149 = verf.f32.pop %v1147
        %v1150 = verf.f32.pop %v1148
        %v1151 = vadd.f32 %v1149, 1.0
        %v1152 = vadd.f32 %v1150, 1.0
        %v1153 = vmul.f32 %v1145, %v1151
        %v1154 = vmul.f32 %v1146, %v1152
        %v1155 = vpack.c.bf16 %v1154, %v1153
        %v1156 = vld [vmem:[%s394] sm:$0xff]
        %v1157 = vld [vmem:[%s394 + $0x8] sm:$0xff]
        %v1158 = vld [vmem:[%s394 + $0x10] sm:$0xff]
        %v1159 = vld [vmem:[%s394 + $0x18] sm:$0xff]
        %v1160 = vld [vmem:[%s394 + $0x20] sm:$0xff]
        %v1161 = vld [vmem:[%s394 + $0x28] sm:$0xff]
        %v1162 = vld [vmem:[%s394 + $0x30] sm:$0xff]
        %v1163 = vld [vmem:[%s394 + $0x38] sm:$0xff]
        %v1164 = vpack.c.bf16 %v1157, %v1156
        %v1165 = vpack.c.bf16 %v1159, %v1158
        %v1166 = vpack.c.bf16 %v1161, %v1160
        %v1167 = vpack.c.bf16 %v1163, %v1162
        %v1168 = vlaneseq
        %v1169 = vshrl.u32 %v1168, 7
        %v1170 = vsub.s32 6, %v1169
        %v1171 = vrot.slane %v408, %v1170
        %vm1172 = vcmask 523264
        %v1174 = vsel %vm1172, %v1155, 0
        %1176 = vmatprep.subr.bf16.mxu0 0
        %1177 = vmatpush1.bf16.msra.mxu0 0
        %1178 = vmatprep.subr.bf16.mxu0 0
        %1179 = vmatpush1.bf16.msra.mxu0 0
        %1180 = vmatprep.subr.bf16.mxu0 0
        %1181 = vmatpush1.bf16.msra.mxu0 0
        %1182 = vmatprep.subr.bf16.mxu0 0
        %1183 = vmatpush1.bf16.msra.mxu0 0
        %1184 = vmatprep.subr.bf16.mxu0 0
        %1185 = vmatpush1.bf16.msra.mxu0 %v1167
        %1186 = vmatprep.subr.bf16.mxu0 0
        %1187 = vmatpush1.bf16.msra.mxu0 %v1166
        %1188 = vmatprep.subr.bf16.mxu0 0
        %1189 = vmatpush1.bf16.msra.mxu0 %v1165
        %1190 = vmatprep.subr.bf16.mxu0 0
        %1191 = vmatpush1.bf16.msra.mxu0 %v1164
        %1192 = vmatprep.subr.bf16.mxu0 0
        %1193 = vmatpush2.bf16.msra.mxu0 0
        %1194 = vmatprep.subr.bf16.mxu0 0
        %1195 = vmatpush2.bf16.msra.mxu0 0
        %1196 = vmatprep.subr.bf16.mxu0 0
        %1197 = vmatpush2.bf16.msra.mxu0 0
        %1198 = vmatprep.subr.bf16.mxu0 0
        %1199 = vmatpush2.bf16.msra.mxu0 0
        %1200 = vmatprep.subr.bf16.mxu0 0
        %1201 = vmatpush2.bf16.msra.mxu0 0
        %1202 = vmatprep.subr.bf16.mxu0 0
        %1203 = vmatpush2.bf16.msra.mxu0 0
        %1204 = vmatprep.subr.bf16.mxu0 0
        %1205 = vmatpush2.bf16.msra.mxu0 0
        %1206 = vmatprep.subr.bf16.mxu0 0
        %1207 = vmatpush2.bf16.msra.mxu0 0
        %1208 = vmatprep.mubr.bf16.mxu0 0
        %1209 = vmatmul.mubr.bf16.gmra.mxu0 %v1174
        %v1210 = vpop.f32.mrf.mxu0
        %v1211 = vadd.f32 %v1171, %v1210
        %v1212 = vpop.f32.mrf.mxu0
        %v1213 = vpop.f32.mrf.mxu0
        %v1214 = vadd.f32 %v1171, %v1213
        %v1215 = vpop.f32.mrf.mxu0
        %1216 = vdwg.mxu0
        %v1217 = vadd.f32 %v1047, %v1211
        %v1218 = vadd.f32 %v1048, %v1214
        %1219 = vst.msk [vmem:[#allocation3] sm:$0xff] %vm409, %v1217
        %1220 = vst.msk [vmem:[#allocation3 + $0x8] sm:$0xff] %vm409, %v1218
        // Predicated region
        $region53: #{tpu_custom_call.1} parent=47 // pred_check
          %p1221 = pneg %p231
        $region54: #{tpu_custom_call.1} parent=47 // pred_check_branch
          %1223 = sbr.rel (%p1221) target = $region56
        $region55: #{tpu_custom_call.1} parent=47 // pred_region
          %s1224 = smul.u32 2, %s23
          %s1226 = ssub.s32 256, 256
          %1227 = vsyncadd [#allocation4], %s1226
          %s1228 = smul.addr %s1224, 128
          %s1229 = scalar_lea.hbm %s7, %s1228
          %s1230 = sshll.u32 [#allocation3], 4
          %s1231 = int_to_ptr.vmem [resolvable:$true] %s1230
          %1236 = dma.vmem_to_hbm [thread:$0]  %s1231, 256, %s1229, [#allocation4], 128, 128, 8
        $region56: #{tpu_custom_call.1} parent=47 // pred_fallthru
          _
        // Predicated region
        $region57: #{tpu_custom_call.1} parent=47 // pred_check
          %p1237 = pneg %p231
        $region58: #{tpu_custom_call.1} parent=47 // pred_check_branch
          %1239 = sbr.rel (%p1237) target = $region60
        $region59: #{tpu_custom_call.1} parent=47 // pred_region
          %1240 = dma.done [#allocation4], 256
        $region60: #{tpu_custom_call.1} parent=47 // pred_fallthru
          _
      $region48: #{tpu_custom_call.1} parent=5 // pred_fallthru
        _
      %p1241 = scmp.le.s32.totalorder 2, %s14
      // Predicated region
      $region61: #{tpu_custom_call.1} parent=5 // pred_check
        %p1242 = pneg %p1241
      $region62: #{tpu_custom_call.1} parent=5 // pred_check_branch
        %1244 = sbr.rel (%p1242) target = $region64
      $region63: #{tpu_custom_call.1} parent=5 // pred_region
        %s1245 = ssub.s32 %s14, 2
      $region64: #{tpu_custom_call.1} parent=5 // pred_fallthru
        _
    $region6: #{tpu_custom_call.1} parent=1 // loop_footer
      %s18 = sadd.s32 1, %s14
    $region7: #{tpu_custom_call.1} parent=1 // loop_footer_branch
      %13 = sbr.rel target = $region3
    $region8: #{tpu_custom_call.1} parent=1 // loop_exit
      _
    %1246 = vsyncpa [#allocation4], 1
    %s1247 = scalar_lea.sflag [#allocation4], 1
    %1248 = vsyncpa %s1247, 1

</llo_original>
